<compile_context>
chip_gen: v6e
topology: v6e:2x2x1
jax: 0.10.0
libtpu: 0.0.40
codegen_flags: <defaults>
</compile_context>

<pallas_src>
import functools
import math

import jax
import jax.numpy as jnp
from jax.experimental import pallas as pl
from jax.experimental.pallas import tpu as pltpu

_HAS_RECIPROCAL = hasattr(pl, "reciprocal")


def _round_up(x, m):
    return ((x + m - 1) // m) * m


# ---------------------------------------------------------------------------
# Fused kernel: flash attention (online softmax over kv blocks) + out-proj + residual
# ---------------------------------------------------------------------------
def _fused_attn_proj_kernel(q_ref, k_ref, v_ref, idn_ref, wt_ref, b_ref, o_ref,
                            m_sc, l_sc, acc_sc, *, kv_len, block_k, mask_kv):
    ki = pl.program_id(2)

    @pl.when(ki == 0)
    def _init():
        m_sc[...] = jnp.full_like(m_sc, -jnp.inf)
        l_sc[...] = jnp.zeros_like(l_sc)
        acc_sc[...] = jnp.zeros_like(acc_sc)

    q = q_ref[0]                      # (H, tq, Dh) bf16, pre-scaled by 1/sqrt(Dh)
    k = k_ref[0]                      # (H, tk, Dh) bf16
    v = v_ref[0]                      # (H, tk, Dh) bf16

    # QK^T on the MXU, fp32 accumulation.  Scale already folded into q.
    s = jnp.einsum("hqd,hkd->hqk", q, k, preferred_element_type=jnp.float32)

    if mask_kv:                       # static: only emitted when Sk % tk != 0
        col = ki * block_k + jax.lax.broadcasted_iota(jnp.int32, s.shape, 2)
        s = jnp.where(col < kv_len, s, -1e30)

    # Online softmax state kept in fp32 (no bf16 VPU/EUP on v5e).
    m_prev = m_sc[...]
    m_new = jnp.maximum(m_prev, s.max(axis=-1, keepdims=True))
    alpha = jnp.exp(m_prev - m_new)
    p = jnp.exp(s - m_new)
    l_sc[...] = alpha * l_sc[...] + p.sum(axis=-1, keepdims=True)
    acc_sc[...] = alpha * acc_sc[...] + jnp.einsum(
        "hqk,hkd->hqd", p.astype(v.dtype), v, preferred_element_type=jnp.float32)
    m_sc[...] = m_new

    @pl.when(ki == pl.num_programs(2) - 1)
    def _finalize():
        if _HAS_RECIPROCAL:
            inv_l = pl.reciprocal(l_sc[...], approx=True)   # EUP slot, ~free
        else:
            inv_l = 1.0 / l_sc[...]
        ctx = (acc_sc[...] * inv_l).astype(wt_ref.dtype)    # (H, tq, Dh) bf16
        n_heads = ctx.shape[0]
        # Fused output projection: x @ W.T == sum_h ctx_h @ W.T[h*Dh:(h+1)*Dh, :]
        proj = jnp.zeros((ctx.shape[1], wt_ref.shape[-1]), jnp.float32)
        for h in range(n_heads):                            # static unroll over heads
            proj = proj + jnp.dot(ctx[h], wt_ref[h],
                                  preferred_element_type=jnp.float32)
        # residual + bias; lane-dense (tq, D) store
        o_ref[0] = (idn_ref[0] + proj + b_ref[...]).astype(o_ref.dtype)


# ---------------------------------------------------------------------------
# Module wrapper (plain-JAX glue mirroring the PyTorch forward exactly)
# ---------------------------------------------------------------------------
def init_params(key, embed_dims):
    kw, kb = jax.random.split(key)
    w = jax.random.normal(kw, (embed_dims, embed_dims), jnp.float32) / math.sqrt(embed_dims)
    b = 0.01 * jax.random.normal(kb, (embed_dims,), jnp.float32)
    return {"proj_w": w, "proj_b": b}


def petr_multihead_flash_attention(params, num_heads, query, key=None, value=None,
                                   identity=None, query_pos=None, key_pos=None,
                                   tq=256, tk=512):
    """Inputs are (num_query, bs, embed_dims) seq-first, exactly as PETR calls it."""
    if key is None:
        key = query
    if value is None:
        value = key
    if identity is None:
        identity = query
    if key_pos is None and query_pos is not None and query_pos.shape == key.shape:
        key_pos = query_pos

    q_in = query + query_pos if query_pos is not None else query
    k_in = key + key_pos if key_pos is not None else key
    v_in = value

    Sq, B, D = q_in.shape
    Sk = k_in.shape[0]
    H = num_heads
    assert D % H == 0, "embed_dims must be divisible by num_heads"
    Dh = D // H
    scale = 1.0 / math.sqrt(Dh)

    # (S, B, D) -> (B, H, S, Dh) bf16 : one fused XLA pass per tensor (add + scale +
    # transpose + cast); bf16 halves the HBM write and the kernel's K/V DMA bytes.
    def to_bhsd(x, s):
        return x.reshape(s, B, H, Dh).transpose(1, 2, 0, 3).astype(jnp.bfloat16)

    qh = to_bhsd(q_in * scale, Sq)      # fold 1/sqrt(Dh) into the existing add
    kh = to_bhsd(k_in, Sk)
    vh = to_bhsd(v_in, Sk)
    idn = jnp.transpose(identity, (1, 0, 2)).astype(jnp.float32)   # (B, Sq, D)

    # Tile sizes: clamp to the (8-aligned) sequence; pad the sequence to a multiple.
    tq = int(min(tq, _round_up(Sq, 8)))
    tk = int(min(tk, _round_up(Sk, 8)))
    Sq_p = _round_up(Sq, tq)
    Sk_p = _round_up(Sk, tk)
    if Sq_p != Sq:
        qh = jnp.pad(qh, ((0, 0), (0, 0), (0, Sq_p - Sq), (0, 0)))
        idn = jnp.pad(idn, ((0, 0), (0, Sq_p - Sq), (0, 0)))
    if Sk_p != Sk:
        kh = jnp.pad(kh, ((0, 0), (0, 0), (0, Sk_p - Sk), (0, 0)))
        vh = jnp.pad(vh, ((0, 0), (0, 0), (0, Sk_p - Sk), (0, 0)))

    # PyTorch Linear: y = x @ W.T + b.  Reshape W.T into per-head (H, Dh, D) slabs so
    # the projection fuses into the attention epilogue without a head transpose.
    wt = params["proj_w"].T.reshape(H, Dh, D).astype(jnp.bfloat16)
    bias = params["proj_b"].reshape(1, D).astype(jnp.float32)

    grid = (B, Sq_p // tq, Sk_p // tk)
    kernel = functools.partial(_fused_attn_proj_kernel, kv_len=Sk, block_k=tk,
                               mask_kv=(Sk % tk != 0))

    out = pl.pallas_call(
        kernel,
        out_shape=jax.ShapeDtypeStruct((B, Sq_p, D), jnp.float32),
        grid_spec=pltpu.PrefetchScalarGridSpec(
            num_scalar_prefetch=0,
            grid=grid,
            in_specs=[
                pl.BlockSpec((1, H, tq, Dh), lambda b, qi, ki: (b, 0, qi, 0)),
                pl.BlockSpec((1, H, tk, Dh), lambda b, qi, ki: (b, 0, ki, 0)),
                pl.BlockSpec((1, H, tk, Dh), lambda b, qi, ki: (b, 0, ki, 0)),
                pl.BlockSpec((1, tq, D), lambda b, qi, ki: (b, qi, 0)),
                pl.BlockSpec((H, Dh, D), lambda b, qi, ki: (0, 0, 0)),
                pl.BlockSpec((1, D), lambda b, qi, ki: (0, 0)),
            ],
            out_specs=pl.BlockSpec((1, tq, D), lambda b, qi, ki: (b, qi, 0)),
            scratch_shapes=[
                pltpu.VMEM((H, tq, 1), jnp.float32),    # running max
                pltpu.VMEM((H, tq, 1), jnp.float32),    # running denom
                pltpu.VMEM((H, tq, Dh), jnp.float32),   # fp32 accumulator
            ],
        ),
        compiler_params=pltpu.CompilerParams(
            dimension_semantics=("parallel", "parallel", "arbitrary"),
            vmem_limit_bytes=64 * 1024 * 1024,
        ),
    )(qh, kh, vh, idn, wt, bias)

    out = out[:, :Sq, :]                      # drop query-padding rows
    return jnp.transpose(out, (1, 0, 2))      # back to (num_query, bs, D); residual already added


# ---------------------------------------------------------------------------
# Pure-JAX reference (fp32, for correctness check)
# ---------------------------------------------------------------------------
def reference_forward(params, num_heads, query, query_pos=None):
    key = query
    value = key
    identity = query
    key_pos = query_pos
    q = query + query_pos if query_pos is not None else query
    k = key + key_pos if key_pos is not None else key
    v = value
    q, k, v = (jnp.transpose(x, (1, 0, 2)) for x in (q, k, v))
    B, Sq, D = q.shape
    Sk = k.shape[1]
    H = num_heads
    Dh = D // H
    qh = q.reshape(B, Sq, H, Dh)
    kh = k.reshape(B, Sk, H, Dh)
    vh = v.reshape(B, Sk, H, Dh)
    s = jnp.einsum("bqhd,bkhd->bhqk", qh, kh) / math.sqrt(Dh)
    p = jax.nn.softmax(s, axis=-1)
    ctx = jnp.einsum("bhqk,bkhd->bqhd", p, vh).reshape(B, Sq, D)
    out = ctx @ params["proj_w"].T + params["proj_b"]
    out = jnp.transpose(out, (1, 0, 2))
    return identity + out


if __name__ == "__main__":
    embed_dims, num_heads = 32, 4        # head_dim = 8
    num_query, bs = 20, 2                # deliberately NOT a tile multiple

    root = jax.random.PRNGKey(0)
    k1, k2, k3 = jax.random.split(root, 3)
    # layout: (num_query, bs, embed_dims) seq-first inputs
    query = jax.random.normal(k1, (num_query, bs, embed_dims), jnp.float32)
    query_pos = jax.random.normal(k2, (num_query, bs, embed_dims), jnp.float32)
    params = init_params(k3, embed_dims)

    ref = reference_forward(params, num_heads, query, query_pos=query_pos)

    # Small explicit tiles: exercises multi-block online softmax + kv tail masking.
    out_tiled = petr_multihead_flash_attention(params, num_heads, query,
                                               query_pos=query_pos, tq=8, tk=8)
    out_tiled = jax.block_until_ready(out_tiled)

    # Default tiles (clamped to the sequence).
    out_def = petr_multihead_flash_attention(params, num_heads, query,
                                             query_pos=query_pos)
    out_def = jax.block_until_ready(out_def)

    assert out_tiled.shape == (num_query, bs, embed_dims)
    assert out_def.shape == (num_query, bs, embed_dims)
    # bf16 matmul operands (matching the original fp16 CUDA FlashMHA) -> loosened tol.
    assert jnp.allclose(out_tiled, ref, atol=5e-2, rtol=5e-2), "tiled mismatch vs reference"
    assert jnp.allclose(out_def, ref, atol=5e-2, rtol=5e-2), "default mismatch vs reference"

    print("KERNEL_OK")
</pallas_src>

<mosaic_0001>
module attributes {stable_mosaic.version = 11 : i64} {
  func.func @_fused_attn_proj_kernel(%arg0: i32, %arg1: i32, %arg2: i32, %arg3: memref<1x4x8x8xbf16, #tpu.memory_space<vmem>>, %arg4: memref<1x4x8x8xbf16, #tpu.memory_space<vmem>>, %arg5: memref<1x4x8x8xbf16, #tpu.memory_space<vmem>>, %arg6: memref<1x8x32xf32, #tpu.memory_space<vmem>>, %arg7: memref<4x8x32xbf16, #tpu.memory_space<vmem>>, %arg8: memref<1x32xf32, #tpu.memory_space<vmem>>, %arg9: memref<1x8x32xf32, #tpu.memory_space<vmem>>, %arg10: memref<4x8x1xf32, #tpu.memory_space<vmem>>, %arg11: memref<4x8x1xf32, #tpu.memory_space<vmem>>, %arg12: memref<4x8x8xf32, #tpu.memory_space<vmem>>) attributes {dimension_semantics = [#tpu.dimension_semantics<parallel>, #tpu.dimension_semantics<parallel>, #tpu.dimension_semantics<arbitrary>], iteration_bounds = array<i64: 2, 3, 3>, scalar_prefetch = 0 : i64, scratch_operands = 3 : i64, tpu.core_type = #tpu.core_type<tc>, window_params = [{transform_indices = @transform_0, window_bounds = array<i64: 1, 4, 8, 8>}, {transform_indices = @transform_1, window_bounds = array<i64: 1, 4, 8, 8>}, {transform_indices = @transform_2, window_bounds = array<i64: 1, 4, 8, 8>}, {transform_indices = @transform_3, window_bounds = array<i64: 1, 8, 32>}, {pipeline_mode = #tpu.pipeline_mode<synchronous>, transform_indices = @transform_4, window_bounds = array<i64: 4, 8, 32>}, {pipeline_mode = #tpu.pipeline_mode<synchronous>, transform_indices = @transform_5, window_bounds = array<i64: 1, 32>}, {transform_indices = @transform_6, window_bounds = array<i64: 1, 8, 32>}]} {
    %c0_i32 = arith.constant 0 : i32
    %0 = arith.cmpi eq, %arg2, %c0_i32 : i32
    %1 = arith.extui %0 : i1 to i32
    %c0_i32_0 = arith.constant 0 : i32
    %2 = arith.cmpi ne, %1, %c0_i32_0 : i32
    scf.if %2 {
      %cst_35 = arith.constant 0xFF800000 : f32
      %44 = vector.broadcast %cst_35 : f32 to vector<4x8x1xf32>
      %c0_36 = arith.constant 0 : index
      %c0_37 = arith.constant 0 : index
      %c0_38 = arith.constant 0 : index
      %45 = vector.load %arg10[%c0_36, %c0_37, %c0_38] : memref<4x8x1xf32, #tpu.memory_space<vmem>>, vector<4x8x1xf32>
      tpu.vector_store %arg10[%c0_36, %c0_37, %c0_38], %44 {strides = array<i32>} : memref<4x8x1xf32, #tpu.memory_space<vmem>>, vector<4x8x1xf32>,
      %cst_39 = arith.constant 0.000000e+00 : f32
      %46 = vector.broadcast %cst_39 : f32 to vector<4x8x1xf32>
      %c0_40 = arith.constant 0 : index
      %c0_41 = arith.constant 0 : index
      %c0_42 = arith.constant 0 : index
      %47 = vector.load %arg11[%c0_40, %c0_41, %c0_42] : memref<4x8x1xf32, #tpu.memory_space<vmem>>, vector<4x8x1xf32>
      tpu.vector_store %arg11[%c0_40, %c0_41, %c0_42], %46 {strides = array<i32>} : memref<4x8x1xf32, #tpu.memory_space<vmem>>, vector<4x8x1xf32>,
      %cst_43 = arith.constant 0.000000e+00 : f32
      %48 = vector.broadcast %cst_43 : f32 to vector<4x8x8xf32>
      %c0_44 = arith.constant 0 : index
      %c0_45 = arith.constant 0 : index
      %c0_46 = arith.constant 0 : index
      %49 = vector.load %arg12[%c0_44, %c0_45, %c0_46] : memref<4x8x8xf32, #tpu.memory_space<vmem>>, vector<4x8x8xf32>
      tpu.vector_store %arg12[%c0_44, %c0_45, %c0_46], %48 {strides = array<i32>} : memref<4x8x8xf32, #tpu.memory_space<vmem>>, vector<4x8x8xf32>,
    } else {
    }
    %c0 = arith.constant 0 : index
    %c0_1 = arith.constant 0 : index
    %c0_2 = arith.constant 0 : index
    %c0_3 = arith.constant 0 : index
    %3 = vector.load %arg3[%c0, %c0_1, %c0_2, %c0_3] : memref<1x4x8x8xbf16, #tpu.memory_space<vmem>>, vector<1x4x8x8xbf16>
    %4 = vector.shape_cast %3 : vector<1x4x8x8xbf16> to vector<4x8x8xbf16>
    %c0_4 = arith.constant 0 : index
    %c0_5 = arith.constant 0 : index
    %c0_6 = arith.constant 0 : index
    %c0_7 = arith.constant 0 : index
    %5 = vector.load %arg4[%c0_4, %c0_5, %c0_6, %c0_7] : memref<1x4x8x8xbf16, #tpu.memory_space<vmem>>, vector<1x4x8x8xbf16>
    %6 = vector.shape_cast %5 : vector<1x4x8x8xbf16> to vector<4x8x8xbf16>
    %c0_8 = arith.constant 0 : index
    %c0_9 = arith.constant 0 : index
    %c0_10 = arith.constant 0 : index
    %c0_11 = arith.constant 0 : index
    %7 = vector.load %arg5[%c0_8, %c0_9, %c0_10, %c0_11] : memref<1x4x8x8xbf16, #tpu.memory_space<vmem>>, vector<1x4x8x8xbf16>
    %8 = vector.shape_cast %7 : vector<1x4x8x8xbf16> to vector<4x8x8xbf16>
    "tpu.trace_start"() <{level = 10 : i32, message = "hqd,hkd->hqk"}> : () -> ()
    %cst = arith.constant dense<0.000000e+00> : vector<4x8x8xf32>
    %9 = tpu.matmul %4, %6, %cst {dimension_numbers = #tpu.dot_dimension_numbers<[2], [2], [1], [1], [0, 0, 0, 1, 1, 1], [0], [0]>} : vector<4x8x8xbf16>, vector<4x8x8xbf16>, vector<4x8x8xf32> -> vector<4x8x8xf32>
    "tpu.trace_stop"() : () -> ()
    %c8_i32 = arith.constant 8 : i32
    %10 = arith.muli %arg2, %c8_i32 : i32
    %11 = tpu.iota {dimensions = array<i32: 2>} : vector<4x8x8xi32>
    %12 = vector.broadcast %10 : i32 to vector<4x8x8xi32>
    %13 = arith.addi %12, %11 : vector<4x8x8xi32>
    %c20_i32 = arith.constant 20 : i32
    %14 = vector.broadcast %c20_i32 : i32 to vector<4x8x8xi32>
    %15 = arith.cmpi slt, %13, %14 : vector<4x8x8xi32>
    %cst_12 = arith.constant -1.000000e+30 : f32
    %16 = vector.broadcast %cst_12 : f32 to vector<4x8x8xf32>
    %17 = arith.select %15, %9, %16 : vector<4x8x8xi1>, vector<4x8x8xf32>
    %c0_13 = arith.constant 0 : index
    %c0_14 = arith.constant 0 : index
    %c0_15 = arith.constant 0 : index
    %18 = vector.load %arg10[%c0_13, %c0_14, %c0_15] : memref<4x8x1xf32, #tpu.memory_space<vmem>>, vector<4x8x1xf32>
    %cst_16 = arith.constant dense<0xFF800000> : vector<4x8xf32>
    %19 = vector.multi_reduction <maximumf>, %17, %cst_16 [2] : vector<4x8x8xf32> to vector<4x8xf32>
    %20 = vector.shape_cast %19 : vector<4x8xf32> to vector<4x8x1xf32>
    %21 = arith.maximumf %18, %20 : vector<4x8x1xf32>
    %22 = arith.subf %18, %21 : vector<4x8x1xf32>
    %23 = math.exp %22 : vector<4x8x1xf32>
    %24 = vector.broadcast %21 : vector<4x8x1xf32> to vector<4x8x8xf32>
    %25 = arith.subf %17, %24 : vector<4x8x8xf32>
    %26 = math.exp %25 : vector<4x8x8xf32>
    %c0_17 = arith.constant 0 : index
    %c0_18 = arith.constant 0 : index
    %c0_19 = arith.constant 0 : index
    %27 = vector.load %arg11[%c0_17, %c0_18, %c0_19] : memref<4x8x1xf32, #tpu.memory_space<vmem>>, vector<4x8x1xf32>
    %28 = arith.mulf %23, %27 : vector<4x8x1xf32>
    %cst_20 = arith.constant dense<0.000000e+00> : vector<4x8xf32>
    %29 = vector.multi_reduction <add>, %26, %cst_20 [2] : vector<4x8x8xf32> to vector<4x8xf32>
    %30 = vector.shape_cast %29 : vector<4x8xf32> to vector<4x8x1xf32>
    %31 = arith.addf %28, %30 : vector<4x8x1xf32>
    %c0_21 = arith.constant 0 : index
    %c0_22 = arith.constant 0 : index
    %c0_23 = arith.constant 0 : index
    %32 = vector.load %arg11[%c0_21, %c0_22, %c0_23] : memref<4x8x1xf32, #tpu.memory_space<vmem>>, vector<4x8x1xf32>
    tpu.vector_store %arg11[%c0_21, %c0_22, %c0_23], %31 {strides = array<i32>} : memref<4x8x1xf32, #tpu.memory_space<vmem>>, vector<4x8x1xf32>,
    %c0_24 = arith.constant 0 : index
    %c0_25 = arith.constant 0 : index
    %c0_26 = arith.constant 0 : index
    %33 = vector.load %arg12[%c0_24, %c0_25, %c0_26] : memref<4x8x8xf32, #tpu.memory_space<vmem>>, vector<4x8x8xf32>
    %34 = vector.broadcast %23 : vector<4x8x1xf32> to vector<4x8x8xf32>
    %35 = arith.mulf %34, %33 : vector<4x8x8xf32>
    %36 = arith.truncf %26 : vector<4x8x8xf32> to vector<4x8x8xbf16>
    "tpu.trace_start"() <{level = 10 : i32, message = "hqk,hkd->hqd"}> : () -> ()
    %cst_27 = arith.constant dense<0.000000e+00> : vector<4x8x8xf32>
    %37 = tpu.matmul %36, %8, %cst_27 {dimension_numbers = #tpu.dot_dimension_numbers<[2], [1], [1], [2], [0, 0, 0, 1, 1, 2], [0], [0]>} : vector<4x8x8xbf16>, vector<4x8x8xbf16>, vector<4x8x8xf32> -> vector<4x8x8xf32>
    "tpu.trace_stop"() : () -> ()
    %38 = arith.addf %35, %37 : vector<4x8x8xf32>
    %c0_28 = arith.constant 0 : index
    %c0_29 = arith.constant 0 : index
    %c0_30 = arith.constant 0 : index
    %39 = vector.load %arg12[%c0_28, %c0_29, %c0_30] : memref<4x8x8xf32, #tpu.memory_space<vmem>>, vector<4x8x8xf32>
    tpu.vector_store %arg12[%c0_28, %c0_29, %c0_30], %38 {strides = array<i32>} : memref<4x8x8xf32, #tpu.memory_space<vmem>>, vector<4x8x8xf32>,
    %c0_31 = arith.constant 0 : index
    %c0_32 = arith.constant 0 : index
    %c0_33 = arith.constant 0 : index
    %40 = vector.load %arg10[%c0_31, %c0_32, %c0_33] : memref<4x8x1xf32, #tpu.memory_space<vmem>>, vector<4x8x1xf32>
    tpu.vector_store %arg10[%c0_31, %c0_32, %c0_33], %21 {strides = array<i32>} : memref<4x8x1xf32, #tpu.memory_space<vmem>>, vector<4x8x1xf32>,
    %c2_i32 = arith.constant 2 : i32
    %41 = arith.cmpi eq, %arg2, %c2_i32 : i32
    %42 = arith.extui %41 : i1 to i32
    %c0_i32_34 = arith.constant 0 : i32
    %43 = arith.cmpi ne, %42, %c0_i32_34 : i32
    scf.if %43 {
      %c0_35 = arith.constant 0 : index
      %c0_36 = arith.constant 0 : index
      %c0_37 = arith.constant 0 : index
      %44 = vector.load %arg11[%c0_35, %c0_36, %c0_37] : memref<4x8x1xf32, #tpu.memory_space<vmem>>, vector<4x8x1xf32>
      %45 = tpu.reciprocal %44 {approx = true} : vector<4x8x1xf32> -> vector<4x8x1xf32>
      %c0_38 = arith.constant 0 : index
      %c0_39 = arith.constant 0 : index
      %c0_40 = arith.constant 0 : index
      %46 = vector.load %arg12[%c0_38, %c0_39, %c0_40] : memref<4x8x8xf32, #tpu.memory_space<vmem>>, vector<4x8x8xf32>
      %47 = vector.broadcast %45 : vector<4x8x1xf32> to vector<4x8x8xf32>
      %48 = arith.mulf %46, %47 : vector<4x8x8xf32>
      %49 = arith.truncf %48 : vector<4x8x8xf32> to vector<4x8x8xbf16>
      %cst_41 = arith.constant 0.000000e+00 : f32
      %50 = vector.broadcast %cst_41 : f32 to vector<8x32xf32>
      %51 = vector.extract_strided_slice %49 {offsets = [0, 0, 0], sizes = [1, 8, 8], strides = [1, 1, 1]} : vector<4x8x8xbf16> to vector<1x8x8xbf16>
      %52 = vector.shape_cast %51 : vector<1x8x8xbf16> to vector<8x8xbf16>
      %c0_42 = arith.constant 0 : index
      %c0_43 = arith.constant 0 : index
      %c0_44 = arith.constant 0 : index
      %53 = vector.load %arg7[%c0_42, %c0_43, %c0_44] : memref<4x8x32xbf16, #tpu.memory_space<vmem>>, vector<1x8x32xbf16>
      %54 = vector.shape_cast %53 : vector<1x8x32xbf16> to vector<8x32xbf16>
      %cst_45 = arith.constant dense<0.000000e+00> : vector<8x32xf32>
      %55 = tpu.matmul %52, %54, %cst_45 {dimension_numbers = #tpu.dot_dimension_numbers<[1], [0], [0], [1], [0, 0, 1, 1], [], []>} : vector<8x8xbf16>, vector<8x32xbf16>, vector<8x32xf32> -> vector<8x32xf32>
      %56 = arith.addf %50, %55 : vector<8x32xf32>
      %57 = vector.extract_strided_slice %49 {offsets = [1, 0, 0], sizes = [1, 8, 8], strides = [1, 1, 1]} : vector<4x8x8xbf16> to vector<1x8x8xbf16>
      %58 = vector.shape_cast %57 : vector<1x8x8xbf16> to vector<8x8xbf16>
      %c1 = arith.constant 1 : index
      %c0_46 = arith.constant 0 : index
      %c0_47 = arith.constant 0 : index
      %59 = vector.load %arg7[%c1, %c0_46, %c0_47] : memref<4x8x32xbf16, #tpu.memory_space<vmem>>, vector<1x8x32xbf16>
      %60 = vector.shape_cast %59 : vector<1x8x32xbf16> to vector<8x32xbf16>
      %cst_48 = arith.constant dense<0.000000e+00> : vector<8x32xf32>
      %61 = tpu.matmul %58, %60, %cst_48 {dimension_numbers = #tpu.dot_dimension_numbers<[1], [0], [0], [1], [0, 0, 1, 1], [], []>} : vector<8x8xbf16>, vector<8x32xbf16>, vector<8x32xf32> -> vector<8x32xf32>
      %62 = arith.addf %56, %61 : vector<8x32xf32>
      %63 = vector.extract_strided_slice %49 {offsets = [2, 0, 0], sizes = [1, 8, 8], strides = [1, 1, 1]} : vector<4x8x8xbf16> to vector<1x8x8xbf16>
      %64 = vector.shape_cast %63 : vector<1x8x8xbf16> to vector<8x8xbf16>
      %c2 = arith.constant 2 : index
      %c0_49 = arith.constant 0 : index
      %c0_50 = arith.constant 0 : index
      %65 = vector.load %arg7[%c2, %c0_49, %c0_50] : memref<4x8x32xbf16, #tpu.memory_space<vmem>>, vector<1x8x32xbf16>
      %66 = vector.shape_cast %65 : vector<1x8x32xbf16> to vector<8x32xbf16>
      %cst_51 = arith.constant dense<0.000000e+00> : vector<8x32xf32>
      %67 = tpu.matmul %64, %66, %cst_51 {dimension_numbers = #tpu.dot_dimension_numbers<[1], [0], [0], [1], [0, 0, 1, 1], [], []>} : vector<8x8xbf16>, vector<8x32xbf16>, vector<8x32xf32> -> vector<8x32xf32>
      %68 = arith.addf %62, %67 : vector<8x32xf32>
      %69 = vector.extract_strided_slice %49 {offsets = [3, 0, 0], sizes = [1, 8, 8], strides = [1, 1, 1]} : vector<4x8x8xbf16> to vector<1x8x8xbf16>
      %70 = vector.shape_cast %69 : vector<1x8x8xbf16> to vector<8x8xbf16>
      %c3 = arith.constant 3 : index
      %c0_52 = arith.constant 0 : index
      %c0_53 = arith.constant 0 : index
      %71 = vector.load %arg7[%c3, %c0_52, %c0_53] : memref<4x8x32xbf16, #tpu.memory_space<vmem>>, vector<1x8x32xbf16>
      %72 = vector.shape_cast %71 : vector<1x8x32xbf16> to vector<8x32xbf16>
      %cst_54 = arith.constant dense<0.000000e+00> : vector<8x32xf32>
      %73 = tpu.matmul %70, %72, %cst_54 {dimension_numbers = #tpu.dot_dimension_numbers<[1], [0], [0], [1], [0, 0, 1, 1], [], []>} : vector<8x8xbf16>, vector<8x32xbf16>, vector<8x32xf32> -> vector<8x32xf32>
      %74 = arith.addf %68, %73 : vector<8x32xf32>
      %c0_55 = arith.constant 0 : index
      %c0_56 = arith.constant 0 : index
      %c0_57 = arith.constant 0 : index
      %75 = vector.load %arg6[%c0_55, %c0_56, %c0_57] : memref<1x8x32xf32, #tpu.memory_space<vmem>>, vector<1x8x32xf32>
      %76 = vector.shape_cast %75 : vector<1x8x32xf32> to vector<8x32xf32>
      %77 = arith.addf %76, %74 : vector<8x32xf32>
      %c0_58 = arith.constant 0 : index
      %c0_59 = arith.constant 0 : index
      %78 = vector.load %arg8[%c0_58, %c0_59] : memref<1x32xf32, #tpu.memory_space<vmem>>, vector<1x32xf32>
      %79 = vector.broadcast %78 : vector<1x32xf32> to vector<8x32xf32>
      %80 = arith.addf %77, %79 : vector<8x32xf32>
      %c0_60 = arith.constant 0 : index
      %c0_61 = arith.constant 0 : index
      %c0_62 = arith.constant 0 : index
      %81 = vector.load %arg9[%c0_60, %c0_61, %c0_62] : memref<1x8x32xf32, #tpu.memory_space<vmem>>, vector<1x8x32xf32>
      %82 = vector.shape_cast %81 : vector<1x8x32xf32> to vector<8x32xf32>
      %83 = vector.shape_cast %80 : vector<8x32xf32> to vector<1x8x32xf32>
      tpu.vector_store %arg9[%c0_60, %c0_61, %c0_62], %83 {strides = array<i32>} : memref<1x8x32xf32, #tpu.memory_space<vmem>>, vector<1x8x32xf32>,
    } else {
    }
    return
  }
  func.func @transform_0(%arg0: i32, %arg1: i32, %arg2: i32) -> (i32, i32, i32, i32) {
    %c0_i32 = arith.constant 0 : i32
    %c0_i32_0 = arith.constant 0 : i32
    %c0_i32_1 = arith.constant 0 : i32
    return %arg0, %c0_i32, %arg1, %c0_i32_0 : i32, i32, i32, i32
  }
  func.func @transform_1(%arg0: i32, %arg1: i32, %arg2: i32) -> (i32, i32, i32, i32) {
    %c0_i32 = arith.constant 0 : i32
    %c0_i32_0 = arith.constant 0 : i32
    %c0_i32_1 = arith.constant 0 : i32
    return %arg0, %c0_i32, %arg2, %c0_i32_0 : i32, i32, i32, i32
  }
  func.func @transform_2(%arg0: i32, %arg1: i32, %arg2: i32) -> (i32, i32, i32, i32) {
    %c0_i32 = arith.constant 0 : i32
    %c0_i32_0 = arith.constant 0 : i32
    %c0_i32_1 = arith.constant 0 : i32
    return %arg0, %c0_i32, %arg2, %c0_i32_0 : i32, i32, i32, i32
  }
  func.func @transform_3(%arg0: i32, %arg1: i32, %arg2: i32) -> (i32, i32, i32) {
    %c0_i32 = arith.constant 0 : i32
    %c0_i32_0 = arith.constant 0 : i32
    return %arg0, %arg1, %c0_i32 : i32, i32, i32
  }
  func.func @transform_4(%arg0: i32, %arg1: i32, %arg2: i32) -> (i32, i32, i32) {
    %c0_i32 = arith.constant 0 : i32
    %c0_i32_0 = arith.constant 0 : i32
    %c0_i32_1 = arith.constant 0 : i32
    %c0_i32_2 = arith.constant 0 : i32
    return %c0_i32, %c0_i32_0, %c0_i32_1 : i32, i32, i32
  }
  func.func @transform_5(%arg0: i32, %arg1: i32, %arg2: i32) -> (i32, i32) {
    %c0_i32 = arith.constant 0 : i32
    %c0_i32_0 = arith.constant 0 : i32
    %c0_i32_1 = arith.constant 0 : i32
    return %c0_i32, %c0_i32_0 : i32, i32
  }
  func.func @transform_6(%arg0: i32, %arg1: i32, %arg2: i32) -> (i32, i32, i32) {
    %c0_i32 = arith.constant 0 : i32
    %c0_i32_0 = arith.constant 0 : i32
    return %arg0, %arg1, %c0_i32 : i32, i32, i32
  }
}

</mosaic_0001>

<llo_original>
// kernel: tpu_custom_call.1
$region0: #{tpu_custom_call.1}
  #allocation0 [shape = 'u32[]', space=smem, size = 0x4, offset = 0x4, fixed_abs, tag = 'smem constant byte address 0x4 - core index']
  #allocation1 [shape = 'u32[144,128]{1,0:T(1,128)}', space=vmem, size = 0x12000, scoped, tag = 'internal scratch']
  #allocation2 [shape = 'f32[4,8,1]{2,1,0:T(8,128)}', space=vmem, size = 0x4000, scoped, tag = 'scratch operand']
  #allocation3 [shape = 'f32[4,8,1]{2,1,0:T(8,128)}', space=vmem, size = 0x4000, scoped, tag = 'scratch operand']
  #allocation4 [shape = 'f32[4,8,8]{2,1,0:T(8,128)}', space=vmem, size = 0x4000, scoped, tag = 'scratch operand']
  %s0 = inlined_call_operand.vmem [shape: bf16[2,4,24,8], index: 0, kind: input, shape index: {}]
  %s1 = inlined_call_operand.vmem [shape: bf16[2,4,24,8], index: 1, kind: input, shape index: {}]
  %s2 = inlined_call_operand.vmem [shape: bf16[2,4,24,8], index: 2, kind: input, shape index: {}]
  %s3 = inlined_call_operand.vmem [shape: f32[2,24,32], index: 3, kind: input, shape index: {}]
  %s4 = inlined_call_operand.vmem [shape: bf16[4,8,32], index: 4, kind: input, shape index: {}]
  %s5 = inlined_call_operand.vmem [shape: f32[1,32], index: 5, kind: input, shape index: {}]
  %s6 = inlined_call_operand.hbm [shape: f32[2,24,32], index: 6, kind: output, shape index: {}]
  %s7 = sld [smem:[#allocation0]]
  $region188: #{tpu_custom_call.1} parent=0
    _
  %s9 = ssub.s32 1, %s7
  %s10 = scalar_select 0, %s9, %s7
  $region1: #{tpu_custom_call.1} parent=0
    #allocation5 [shape = 'u8[16384]{0}', space=vmem, size = 0x4000, scoped, tag = 'input window, operand 0']
    #allocation6 [shape = 'u8[16384]{0}', space=vmem, size = 0x4000, scoped, tag = 'input window, operand 1']
    #allocation7 [shape = 'u8[16384]{0}', space=vmem, size = 0x4000, scoped, tag = 'input window, operand 2']
    #allocation8 [shape = 'u8[8192]{0}', space=vmem, size = 0x2000, scoped, tag = 'output window, operand 0']
    #allocation9 [shape = 's32[2]{0}', space=sflag, size = 0x8, scoped, tag = 'scoped memory for tpu_custom_call.1']
    %11 = vsyncpa [#allocation9], 0
    %s12 = scalar_lea.sflag [#allocation9], 1
    %13 = vsyncpa %s12, 0
    loop: start=0, step=1, limit=20
    $region2: #{tpu_custom_call.1} parent=1 // loop_pre_header
      _
    $region3: #{tpu_custom_call.1} parent=1 // loop_header
      %s15 = sphi 0, %s19
      %p16 = scmp.ge.s32.totalorder %s15, 20
      %s22 = sphi 0, %s41
      %s23 = sphi 0, %s37
      %s24 = sphi 0, %s33
      %s25 = sphi 0, %s22
      %s26 = sphi 0, %s23
      %s27 = sphi 0, %s24
      %s28 = sphi 0, %s25
      %s29 = sphi 0, %s26
      %s30 = sphi 0, %s27
      %s46 = sphi 0, %s48
      %s49 = sphi 0, %s46
      %s50 = sphi 0, %s49
      %s66 = sphi 0, %s50
      %s74 = sphi 0, %s76
      %s77 = sphi 0, %s74
      %s78 = sphi 0, %s77
      %s94 = sphi 0, %s78
      %s102 = sphi 0, %s104
      %s105 = sphi 0, %s102
      %s106 = sphi 0, %s105
      %s122 = sphi 0, %s106
      %s130 = sphi 0, %s132
      %s133 = sphi 0, %s130
      %s134 = sphi 0, %s133
      %s150 = sphi 0, %s134
      %s154 = sphi 0, %s154
      %s156 = sphi 0, %s154
      %s157 = sphi 0, %s156
      %s171 = sphi 0, %s157
      %s175 = sphi 0, %s175
      %s177 = sphi 0, %s175
      %s178 = sphi 0, %s177
      %s192 = sphi 0, %s178
      %s200 = sphi 0, %s202
      %s203 = sphi 0, %s200
      %s204 = sphi 0, %s203
      %s220 = sphi 0, %s204
    $region4: #{tpu_custom_call.1} parent=1 // loop_header_branch
      %18 = sbr.rel (%p16) target = $region8
    $region5: #{tpu_custom_call.1} parent=1 // loop_body
      %s20 = ssub.s32 %s15, 1
      %s21 = ssub.s32 %s15, 2
      %s31 = sadd.s32 1, %s24
      %p32 = scmp.ge.s32.totalorder %s31, 3
      %s33 = scalar_select %p32, 0, %s31
      %s34 = sadd.s32 1, %s23
      %s35 = scalar_select %p32, %s34, %s23
      %p36 = scmp.ge.s32.totalorder %s35, 3
      %s37 = scalar_select %p36, 0, %s35
      %s38 = sadd.s32 1, %s22
      %s39 = scalar_select %p36, %s38, %s22
      %p40 = scmp.ge.s32.totalorder %s39, 2
      %s41 = scalar_select %p40, 0, %s39
      %s42 = ssub.s32 %s22, %s41
      %s43 = ssub.s32 %s23, %s37
      %s44 = sor.u32 %s42, %s43
      %p45 = scmp.eq.s32.totalorder %s44, 0
      %s47 = sadd.s32 %s46, 1
      %s48 = scalar_select %p45, %s46, %s47
      %p51 = pneg %p45
      %p52 = scmp.eq.s32.totalorder %s15, 17
      %p53 = por %p51, %p52
      %p54 = scmp.ne.s32.totalorder %s46, %s49
      %p55 = scmp.eq.s32.totalorder %s15, 0
      %p56 = por %p54, %p55
      %p57 = scmp.ne.s32.totalorder %s46, %s49
      %p58 = scmp.eq.s32.totalorder %s20, 17
      %p59 = por %p57, %p58
      %p60 = scmp.ne.s32.totalorder %s49, %s50
      %p61 = scmp.eq.s32.totalorder %s20, 0
      %p62 = por %p60, %p61
      %p63 = scmp.ne.s32.totalorder %s49, %s50
      %p64 = scmp.eq.s32.totalorder %s21, 17
      %p65 = por %p63, %p64
      %p67 = scmp.ne.s32.totalorder %s50, %s66
      %p68 = scmp.eq.s32.totalorder %s21, 0
      %p69 = por %p67, %p68
      %s70 = ssub.s32 %s22, %s41
      %s71 = ssub.s32 %s24, %s33
      %s72 = sor.u32 %s70, %s71
      %p73 = scmp.eq.s32.totalorder %s72, 0
      %s75 = sadd.s32 %s74, 1
      %s76 = scalar_select %p73, %s74, %s75
      %p79 = pneg %p73
      %p80 = scmp.eq.s32.totalorder %s15, 17
      %p81 = por %p79, %p80
      %p82 = scmp.ne.s32.totalorder %s74, %s77
      %p83 = scmp.eq.s32.totalorder %s15, 0
      %p84 = por %p82, %p83
      %p85 = scmp.ne.s32.totalorder %s74, %s77
      %p86 = scmp.eq.s32.totalorder %s20, 17
      %p87 = por %p85, %p86
      %p88 = scmp.ne.s32.totalorder %s77, %s78
      %p89 = scmp.eq.s32.totalorder %s20, 0
      %p90 = por %p88, %p89
      %p91 = scmp.ne.s32.totalorder %s77, %s78
      %p92 = scmp.eq.s32.totalorder %s21, 17
      %p93 = por %p91, %p92
      %p95 = scmp.ne.s32.totalorder %s78, %s94
      %p96 = scmp.eq.s32.totalorder %s21, 0
      %p97 = por %p95, %p96
      %s98 = ssub.s32 %s22, %s41
      %s99 = ssub.s32 %s24, %s33
      %s100 = sor.u32 %s98, %s99
      %p101 = scmp.eq.s32.totalorder %s100, 0
      %s103 = sadd.s32 %s102, 1
      %s104 = scalar_select %p101, %s102, %s103
      %p107 = pneg %p101
      %p108 = scmp.eq.s32.totalorder %s15, 17
      %p109 = por %p107, %p108
      %p110 = scmp.ne.s32.totalorder %s102, %s105
      %p111 = scmp.eq.s32.totalorder %s15, 0
      %p112 = por %p110, %p111
      %p113 = scmp.ne.s32.totalorder %s102, %s105
      %p114 = scmp.eq.s32.totalorder %s20, 17
      %p115 = por %p113, %p114
      %p116 = scmp.ne.s32.totalorder %s105, %s106
      %p117 = scmp.eq.s32.totalorder %s20, 0
      %p118 = por %p116, %p117
      %p119 = scmp.ne.s32.totalorder %s105, %s106
      %p120 = scmp.eq.s32.totalorder %s21, 17
      %p121 = por %p119, %p120
      %p123 = scmp.ne.s32.totalorder %s106, %s122
      %p124 = scmp.eq.s32.totalorder %s21, 0
      %p125 = por %p123, %p124
      %s126 = ssub.s32 %s22, %s41
      %s127 = ssub.s32 %s23, %s37
      %s128 = sor.u32 %s126, %s127
      %p129 = scmp.eq.s32.totalorder %s128, 0
      %s131 = sadd.s32 %s130, 1
      %s132 = scalar_select %p129, %s130, %s131
      %p135 = pneg %p129
      %p136 = scmp.eq.s32.totalorder %s15, 17
      %p137 = por %p135, %p136
      %p138 = scmp.ne.s32.totalorder %s130, %s133
      %p139 = scmp.eq.s32.totalorder %s15, 0
      %p140 = por %p138, %p139
      %p141 = scmp.ne.s32.totalorder %s130, %s133
      %p142 = scmp.eq.s32.totalorder %s20, 17
      %p143 = por %p141, %p142
      %p144 = scmp.ne.s32.totalorder %s133, %s134
      %p145 = scmp.eq.s32.totalorder %s20, 0
      %p146 = por %p144, %p145
      %p147 = scmp.ne.s32.totalorder %s133, %s134
      %p148 = scmp.eq.s32.totalorder %s21, 17
      %p149 = por %p147, %p148
      %p151 = scmp.ne.s32.totalorder %s134, %s150
      %p152 = scmp.eq.s32.totalorder %s21, 0
      %p153 = por %p151, %p152
      %s155 = sadd.s32 %s154, 1
      %p158 = scmp.eq.s32.totalorder %s15, 17
      %p159 = scmp.ne.s32.totalorder %s154, %s156
      %p160 = scmp.eq.s32.totalorder %s15, 0
      %p161 = por %p159, %p160
      %p162 = scmp.ne.s32.totalorder %s154, %s156
      %p163 = scmp.eq.s32.totalorder %s20, 17
      %p164 = por %p162, %p163
      %p165 = scmp.ne.s32.totalorder %s156, %s157
      %p166 = scmp.eq.s32.totalorder %s20, 0
      %p167 = por %p165, %p166
      %p168 = scmp.ne.s32.totalorder %s156, %s157
      %p169 = scmp.eq.s32.totalorder %s21, 17
      %p170 = por %p168, %p169
      %p172 = scmp.ne.s32.totalorder %s157, %s171
      %p173 = scmp.eq.s32.totalorder %s21, 0
      %p174 = por %p172, %p173
      %s176 = sadd.s32 %s175, 1
      %p179 = scmp.eq.s32.totalorder %s15, 17
      %p180 = scmp.ne.s32.totalorder %s175, %s177
      %p181 = scmp.eq.s32.totalorder %s15, 0
      %p182 = por %p180, %p181
      %p183 = scmp.ne.s32.totalorder %s175, %s177
      %p184 = scmp.eq.s32.totalorder %s20, 17
      %p185 = por %p183, %p184
      %p186 = scmp.ne.s32.totalorder %s177, %s178
      %p187 = scmp.eq.s32.totalorder %s20, 0
      %p188 = por %p186, %p187
      %p189 = scmp.ne.s32.totalorder %s177, %s178
      %p190 = scmp.eq.s32.totalorder %s21, 17
      %p191 = por %p189, %p190
      %p193 = scmp.ne.s32.totalorder %s178, %s192
      %p194 = scmp.eq.s32.totalorder %s21, 0
      %p195 = por %p193, %p194
      %s196 = ssub.s32 %s22, %s41
      %s197 = ssub.s32 %s23, %s37
      %s198 = sor.u32 %s196, %s197
      %p199 = scmp.eq.s32.totalorder %s198, 0
      %s201 = sadd.s32 %s200, 1
      %s202 = scalar_select %p199, %s200, %s201
      %p205 = pneg %p199
      %p206 = scmp.eq.s32.totalorder %s15, 17
      %p207 = por %p205, %p206
      %p208 = scmp.ne.s32.totalorder %s200, %s203
      %p209 = scmp.eq.s32.totalorder %s15, 0
      %p210 = por %p208, %p209
      %p211 = scmp.ne.s32.totalorder %s200, %s203
      %p212 = scmp.eq.s32.totalorder %s20, 17
      %p213 = por %p211, %p212
      %p214 = scmp.ne.s32.totalorder %s203, %s204
      %p215 = scmp.eq.s32.totalorder %s20, 0
      %p216 = por %p214, %p215
      %p217 = scmp.ne.s32.totalorder %s203, %s204
      %p218 = scmp.eq.s32.totalorder %s21, 17
      %p219 = por %p217, %p218
      %p221 = scmp.ne.s32.totalorder %s204, %s220
      %p222 = scmp.eq.s32.totalorder %s21, 0
      %p223 = por %p221, %p222
      %p224 = scmp.le.s32.totalorder 1, %s15
      %p225 = scmp.lt.s32.totalorder %s15, 19
      %p226 = pnand %p224, %p225
      %p227 = pneg %p226
      // Predicated region
      $region9: #{tpu_custom_call.1} parent=5 // pred_check
        _
      $region10: #{tpu_custom_call.1} parent=5 // pred_check_branch
        %229 = sbr.rel (%p226) target = $region12
      $region11: #{tpu_custom_call.1} parent=5 // pred_region
        %s230 = ssub.s32 %s15, 1
        // Predicated region
        $region13: #{tpu_custom_call.1} parent=11 // pred_check
          %p231 = pneg %p167
        $region14: #{tpu_custom_call.1} parent=11 // pred_check_branch
          %233 = sbr.rel (%p231) target = $region16
        $region15: #{tpu_custom_call.1} parent=11 // pred_region
          _
        $region16: #{tpu_custom_call.1} parent=11 // pred_fallthru
          _
        // Predicated region
        $region17: #{tpu_custom_call.1} parent=11 // pred_check
          %p234 = pneg %p188
        $region18: #{tpu_custom_call.1} parent=11 // pred_check_branch
          %236 = sbr.rel (%p234) target = $region20
        $region19: #{tpu_custom_call.1} parent=11 // pred_region
          _
        $region20: #{tpu_custom_call.1} parent=11 // pred_fallthru
          _
      $region12: #{tpu_custom_call.1} parent=5 // pred_fallthru
        _
      %p237 = scmp.lt.s32.totalorder %s15, 18
      // Predicated region
      $region21: #{tpu_custom_call.1} parent=5 // pred_check
        %p238 = pneg %p237
      $region22: #{tpu_custom_call.1} parent=5 // pred_check_branch
        %240 = sbr.rel (%p238) target = $region24
      $region23: #{tpu_custom_call.1} parent=5 // pred_region
        // Predicated region
        $region25: #{tpu_custom_call.1} parent=23 // pred_check
          %p241 = pneg %p56
        $region26: #{tpu_custom_call.1} parent=23 // pred_check_branch
          %243 = sbr.rel (%p241) target = $region28
        $region27: #{tpu_custom_call.1} parent=23 // pred_region
          %s244 = sand.u32 %s46, 1
          %s245 = sand.u32 %s46, 1
          %s246 = smul.addr %s245, 16
          %s247 = scalar_lea.vmem [#allocation5], %s246
          %s248 = smul.addr %s22, 12
          %s249 = sadd.s32 %s23, %s248
          %s250 = smul.addr %s249, 4
          %s251 = scalar_lea.vmem %s0, %s250
          // Predicated region
          $region29: #{tpu_custom_call.1} parent=27 // pred_check
            _
          $region30: #{tpu_custom_call.1} parent=27 // pred_check_branch
            %253 = sbr.rel (0) target = $region32
          $region31: #{tpu_custom_call.1} parent=27 // pred_region
            // Predicated region
            $region33: #{tpu_custom_call.1} parent=31 // pred_check
              _
            $region34: #{tpu_custom_call.1} parent=31 // pred_check_branch
              %255 = sbr.rel target = $region36
            $region35: #{tpu_custom_call.1} parent=31 // pred_region
              // Predicated region
              $region48: #{tpu_custom_call.1} parent=35 // pred_check
                _
              $region49: #{tpu_custom_call.1} parent=35 // pred_check_branch
                %277 = sbr.rel (0) target = $region51
              $region50: #{tpu_custom_call.1} parent=35 // pred_region
                loop: start=0, step=1, limit=1
                $region52: #{tpu_custom_call.1} parent=50 // loop_pre_header
                  _
                $region53: #{tpu_custom_call.1} parent=50 // loop_header
                  %s279 = sphi 0, %s283
                  %p280 = scmp.ge.s32.totalorder %s279, 1
                  %s284 = sphi %s251, %s251
                  %s285 = sphi %s247, %s247
                $region54: #{tpu_custom_call.1} parent=50 // loop_header_branch
                  %282 = sbr.rel (%p280) target = $region58
                $region55: #{tpu_custom_call.1} parent=50 // loop_body
                  _
                $region56: #{tpu_custom_call.1} parent=50 // loop_footer
                  %s283 = sadd.s32 1, %s279
                $region57: #{tpu_custom_call.1} parent=50 // loop_footer_branch
                  %278 = sbr.rel target = $region53
                $region58: #{tpu_custom_call.1} parent=50 // loop_exit
                  _
                %s287 = ssub.s32 16, 1
                loop: start=0, step=1, limit=1
                $region59: #{tpu_custom_call.1} parent=50 // loop_pre_header
                  _
                $region60: #{tpu_custom_call.1} parent=50 // loop_header
                  %s289 = sphi 0, %s293
                  %p290 = scmp.ge.s32.totalorder %s289, 1
                  %s294 = sphi %s251, %s251
                  %s295 = sphi %s247, %s247
                $region61: #{tpu_custom_call.1} parent=50 // loop_header_branch
                  %292 = sbr.rel (%p290) target = $region65
                $region62: #{tpu_custom_call.1} parent=50 // loop_body
                  %v296 = vld [vmem:[%s294] sm:%s287]
                  %297 = vst [vmem:[%s295] sm:%s287] %v296
                  %v298 = vld [vmem:[%s294 + $0xc] sm:%s287]
                  %299 = vst [vmem:[%s295 + $0x4] sm:%s287] %v298
                  %v300 = vld [vmem:[%s294 + $0x18] sm:%s287]
                  %301 = vst [vmem:[%s295 + $0x8] sm:%s287] %v300
                  %v302 = vld [vmem:[%s294 + $0x24] sm:%s287]
                  %303 = vst [vmem:[%s295 + $0xc] sm:%s287] %v302
                $region63: #{tpu_custom_call.1} parent=50 // loop_footer
                  %s293 = sadd.s32 1, %s289
                $region64: #{tpu_custom_call.1} parent=50 // loop_footer_branch
                  %288 = sbr.rel target = $region60
                $region65: #{tpu_custom_call.1} parent=50 // loop_exit
                  _
              $region51: #{tpu_custom_call.1} parent=35 // pred_fallthru
                _
            $region36: #{tpu_custom_call.1} parent=31 // pred_fallthru
              _
            // Predicated region
            $region37: #{tpu_custom_call.1} parent=31 // pred_check
              _
            $region38: #{tpu_custom_call.1} parent=31 // pred_check_branch
              %257 = sbr.rel (0) target = $region40
            $region39: #{tpu_custom_call.1} parent=31 // pred_region
              %s259 = ssub.s32 16, 1
              loop: start=0, step=1, limit=1
              $region41: #{tpu_custom_call.1} parent=39 // loop_pre_header
                _
              $region42: #{tpu_custom_call.1} parent=39 // loop_header
                %s261 = sphi 0, %s265
                %p262 = scmp.ge.s32.totalorder %s261, 1
                %s266 = sphi %s251, %s251
                %s267 = sphi %s247, %s247
              $region43: #{tpu_custom_call.1} parent=39 // loop_header_branch
                %264 = sbr.rel (%p262) target = $region47
              $region44: #{tpu_custom_call.1} parent=39 // loop_body
                %v268 = vld [vmem:[%s266] sm:%s259]
                %269 = vst [vmem:[%s267] sm:%s259] %v268
                %v270 = vld [vmem:[%s266 + $0xc] sm:%s259]
                %271 = vst [vmem:[%s267 + $0x4] sm:%s259] %v270
                %v272 = vld [vmem:[%s266 + $0x18] sm:%s259]
                %273 = vst [vmem:[%s267 + $0x8] sm:%s259] %v272
                %v274 = vld [vmem:[%s266 + $0x24] sm:%s259]
                %275 = vst [vmem:[%s267 + $0xc] sm:%s259] %v274
              $region45: #{tpu_custom_call.1} parent=39 // loop_footer
                %s265 = sadd.s32 1, %s261
              $region46: #{tpu_custom_call.1} parent=39 // loop_footer_branch
                %260 = sbr.rel target = $region42
              $region47: #{tpu_custom_call.1} parent=39 // loop_exit
                _
            $region40: #{tpu_custom_call.1} parent=31 // pred_fallthru
              _
          $region32: #{tpu_custom_call.1} parent=27 // pred_fallthru
            _
          %304 = vnop
        $region28: #{tpu_custom_call.1} parent=23 // pred_fallthru
          _
        // Predicated region
        $region66: #{tpu_custom_call.1} parent=23 // pred_check
          %p305 = pneg %p84
        $region67: #{tpu_custom_call.1} parent=23 // pred_check_branch
          %307 = sbr.rel (%p305) target = $region69
        $region68: #{tpu_custom_call.1} parent=23 // pred_region
          %s308 = sand.u32 %s74, 1
          %s309 = sand.u32 %s74, 1
          %s310 = smul.addr %s309, 16
          %s311 = scalar_lea.vmem [#allocation6], %s310
          %s312 = smul.addr %s22, 12
          %s313 = sadd.s32 %s24, %s312
          %s314 = smul.addr %s313, 4
          %s315 = scalar_lea.vmem %s1, %s314
          // Predicated region
          $region70: #{tpu_custom_call.1} parent=68 // pred_check
            _
          $region71: #{tpu_custom_call.1} parent=68 // pred_check_branch
            %317 = sbr.rel (0) target = $region73
          $region72: #{tpu_custom_call.1} parent=68 // pred_region
            // Predicated region
            $region74: #{tpu_custom_call.1} parent=72 // pred_check
              _
            $region75: #{tpu_custom_call.1} parent=72 // pred_check_branch
              %319 = sbr.rel target = $region77
            $region76: #{tpu_custom_call.1} parent=72 // pred_region
              // Predicated region
              $region89: #{tpu_custom_call.1} parent=76 // pred_check
                _
              $region90: #{tpu_custom_call.1} parent=76 // pred_check_branch
                %341 = sbr.rel (0) target = $region92
              $region91: #{tpu_custom_call.1} parent=76 // pred_region
                loop: start=0, step=1, limit=1
                $region93: #{tpu_custom_call.1} parent=91 // loop_pre_header
                  _
                $region94: #{tpu_custom_call.1} parent=91 // loop_header
                  %s343 = sphi 0, %s347
                  %p344 = scmp.ge.s32.totalorder %s343, 1
                  %s348 = sphi %s315, %s315
                  %s349 = sphi %s311, %s311
                $region95: #{tpu_custom_call.1} parent=91 // loop_header_branch
                  %346 = sbr.rel (%p344) target = $region99
                $region96: #{tpu_custom_call.1} parent=91 // loop_body
                  _
                $region97: #{tpu_custom_call.1} parent=91 // loop_footer
                  %s347 = sadd.s32 1, %s343
                $region98: #{tpu_custom_call.1} parent=91 // loop_footer_branch
                  %342 = sbr.rel target = $region94
                $region99: #{tpu_custom_call.1} parent=91 // loop_exit
                  _
                %s351 = ssub.s32 16, 1
                loop: start=0, step=1, limit=1
                $region100: #{tpu_custom_call.1} parent=91 // loop_pre_header
                  _
                $region101: #{tpu_custom_call.1} parent=91 // loop_header
                  %s353 = sphi 0, %s357
                  %p354 = scmp.ge.s32.totalorder %s353, 1
                  %s358 = sphi %s315, %s315
                  %s359 = sphi %s311, %s311
                $region102: #{tpu_custom_call.1} parent=91 // loop_header_branch
                  %356 = sbr.rel (%p354) target = $region106
                $region103: #{tpu_custom_call.1} parent=91 // loop_body
                  %v360 = vld [vmem:[%s358] sm:%s351]
                  %361 = vst [vmem:[%s359] sm:%s351] %v360
                  %v362 = vld [vmem:[%s358 + $0xc] sm:%s351]
                  %363 = vst [vmem:[%s359 + $0x4] sm:%s351] %v362
                  %v364 = vld [vmem:[%s358 + $0x18] sm:%s351]
                  %365 = vst [vmem:[%s359 + $0x8] sm:%s351] %v364
                  %v366 = vld [vmem:[%s358 + $0x24] sm:%s351]
                  %367 = vst [vmem:[%s359 + $0xc] sm:%s351] %v366
                $region104: #{tpu_custom_call.1} parent=91 // loop_footer
                  %s357 = sadd.s32 1, %s353
                $region105: #{tpu_custom_call.1} parent=91 // loop_footer_branch
                  %352 = sbr.rel target = $region101
                $region106: #{tpu_custom_call.1} parent=91 // loop_exit
                  _
              $region92: #{tpu_custom_call.1} parent=76 // pred_fallthru
                _
            $region77: #{tpu_custom_call.1} parent=72 // pred_fallthru
              _
            // Predicated region
            $region78: #{tpu_custom_call.1} parent=72 // pred_check
              _
            $region79: #{tpu_custom_call.1} parent=72 // pred_check_branch
              %321 = sbr.rel (0) target = $region81
            $region80: #{tpu_custom_call.1} parent=72 // pred_region
              %s323 = ssub.s32 16, 1
              loop: start=0, step=1, limit=1
              $region82: #{tpu_custom_call.1} parent=80 // loop_pre_header
                _
              $region83: #{tpu_custom_call.1} parent=80 // loop_header
                %s325 = sphi 0, %s329
                %p326 = scmp.ge.s32.totalorder %s325, 1
                %s330 = sphi %s315, %s315
                %s331 = sphi %s311, %s311
              $region84: #{tpu_custom_call.1} parent=80 // loop_header_branch
                %328 = sbr.rel (%p326) target = $region88
              $region85: #{tpu_custom_call.1} parent=80 // loop_body
                %v332 = vld [vmem:[%s330] sm:%s323]
                %333 = vst [vmem:[%s331] sm:%s323] %v332
                %v334 = vld [vmem:[%s330 + $0xc] sm:%s323]
                %335 = vst [vmem:[%s331 + $0x4] sm:%s323] %v334
                %v336 = vld [vmem:[%s330 + $0x18] sm:%s323]
                %337 = vst [vmem:[%s331 + $0x8] sm:%s323] %v336
                %v338 = vld [vmem:[%s330 + $0x24] sm:%s323]
                %339 = vst [vmem:[%s331 + $0xc] sm:%s323] %v338
              $region86: #{tpu_custom_call.1} parent=80 // loop_footer
                %s329 = sadd.s32 1, %s325
              $region87: #{tpu_custom_call.1} parent=80 // loop_footer_branch
                %324 = sbr.rel target = $region83
              $region88: #{tpu_custom_call.1} parent=80 // loop_exit
                _
            $region81: #{tpu_custom_call.1} parent=72 // pred_fallthru
              _
          $region73: #{tpu_custom_call.1} parent=68 // pred_fallthru
            _
          %368 = vnop
        $region69: #{tpu_custom_call.1} parent=23 // pred_fallthru
          _
        // Predicated region
        $region107: #{tpu_custom_call.1} parent=23 // pred_check
          %p369 = pneg %p112
        $region108: #{tpu_custom_call.1} parent=23 // pred_check_branch
          %371 = sbr.rel (%p369) target = $region110
        $region109: #{tpu_custom_call.1} parent=23 // pred_region
          %s372 = sand.u32 %s102, 1
          %s373 = sand.u32 %s102, 1
          %s374 = smul.addr %s373, 16
          %s375 = scalar_lea.vmem [#allocation7], %s374
          %s376 = smul.addr %s22, 12
          %s377 = sadd.s32 %s24, %s376
          %s378 = smul.addr %s377, 4
          %s379 = scalar_lea.vmem %s2, %s378
          // Predicated region
          $region111: #{tpu_custom_call.1} parent=109 // pred_check
            _
          $region112: #{tpu_custom_call.1} parent=109 // pred_check_branch
            %381 = sbr.rel (0) target = $region114
          $region113: #{tpu_custom_call.1} parent=109 // pred_region
            // Predicated region
            $region115: #{tpu_custom_call.1} parent=113 // pred_check
              _
            $region116: #{tpu_custom_call.1} parent=113 // pred_check_branch
              %383 = sbr.rel target = $region118
            $region117: #{tpu_custom_call.1} parent=113 // pred_region
              // Predicated region
              $region130: #{tpu_custom_call.1} parent=117 // pred_check
                _
              $region131: #{tpu_custom_call.1} parent=117 // pred_check_branch
                %405 = sbr.rel (0) target = $region133
              $region132: #{tpu_custom_call.1} parent=117 // pred_region
                loop: start=0, step=1, limit=1
                $region134: #{tpu_custom_call.1} parent=132 // loop_pre_header
                  _
                $region135: #{tpu_custom_call.1} parent=132 // loop_header
                  %s407 = sphi 0, %s411
                  %p408 = scmp.ge.s32.totalorder %s407, 1
                  %s412 = sphi %s379, %s379
                  %s413 = sphi %s375, %s375
                $region136: #{tpu_custom_call.1} parent=132 // loop_header_branch
                  %410 = sbr.rel (%p408) target = $region140
                $region137: #{tpu_custom_call.1} parent=132 // loop_body
                  _
                $region138: #{tpu_custom_call.1} parent=132 // loop_footer
                  %s411 = sadd.s32 1, %s407
                $region139: #{tpu_custom_call.1} parent=132 // loop_footer_branch
                  %406 = sbr.rel target = $region135
                $region140: #{tpu_custom_call.1} parent=132 // loop_exit
                  _
                %s415 = ssub.s32 16, 1
                loop: start=0, step=1, limit=1
                $region141: #{tpu_custom_call.1} parent=132 // loop_pre_header
                  _
                $region142: #{tpu_custom_call.1} parent=132 // loop_header
                  %s417 = sphi 0, %s421
                  %p418 = scmp.ge.s32.totalorder %s417, 1
                  %s422 = sphi %s379, %s379
                  %s423 = sphi %s375, %s375
                $region143: #{tpu_custom_call.1} parent=132 // loop_header_branch
                  %420 = sbr.rel (%p418) target = $region147
                $region144: #{tpu_custom_call.1} parent=132 // loop_body
                  %v424 = vld [vmem:[%s422] sm:%s415]
                  %425 = vst [vmem:[%s423] sm:%s415] %v424
                  %v426 = vld [vmem:[%s422 + $0xc] sm:%s415]
                  %427 = vst [vmem:[%s423 + $0x4] sm:%s415] %v426
                  %v428 = vld [vmem:[%s422 + $0x18] sm:%s415]
                  %429 = vst [vmem:[%s423 + $0x8] sm:%s415] %v428
                  %v430 = vld [vmem:[%s422 + $0x24] sm:%s415]
                  %431 = vst [vmem:[%s423 + $0xc] sm:%s415] %v430
                $region145: #{tpu_custom_call.1} parent=132 // loop_footer
                  %s421 = sadd.s32 1, %s417
                $region146: #{tpu_custom_call.1} parent=132 // loop_footer_branch
                  %416 = sbr.rel target = $region142
                $region147: #{tpu_custom_call.1} parent=132 // loop_exit
                  _
              $region133: #{tpu_custom_call.1} parent=117 // pred_fallthru
                _
            $region118: #{tpu_custom_call.1} parent=113 // pred_fallthru
              _
            // Predicated region
            $region119: #{tpu_custom_call.1} parent=113 // pred_check
              _
            $region120: #{tpu_custom_call.1} parent=113 // pred_check_branch
              %385 = sbr.rel (0) target = $region122
            $region121: #{tpu_custom_call.1} parent=113 // pred_region
              %s387 = ssub.s32 16, 1
              loop: start=0, step=1, limit=1
              $region123: #{tpu_custom_call.1} parent=121 // loop_pre_header
                _
              $region124: #{tpu_custom_call.1} parent=121 // loop_header
                %s389 = sphi 0, %s393
                %p390 = scmp.ge.s32.totalorder %s389, 1
                %s394 = sphi %s379, %s379
                %s395 = sphi %s375, %s375
              $region125: #{tpu_custom_call.1} parent=121 // loop_header_branch
                %392 = sbr.rel (%p390) target = $region129
              $region126: #{tpu_custom_call.1} parent=121 // loop_body
                %v396 = vld [vmem:[%s394] sm:%s387]
                %397 = vst [vmem:[%s395] sm:%s387] %v396
                %v398 = vld [vmem:[%s394 + $0xc] sm:%s387]
                %399 = vst [vmem:[%s395 + $0x4] sm:%s387] %v398
                %v400 = vld [vmem:[%s394 + $0x18] sm:%s387]
                %401 = vst [vmem:[%s395 + $0x8] sm:%s387] %v400
                %v402 = vld [vmem:[%s394 + $0x24] sm:%s387]
                %403 = vst [vmem:[%s395 + $0xc] sm:%s387] %v402
              $region127: #{tpu_custom_call.1} parent=121 // loop_footer
                %s393 = sadd.s32 1, %s389
              $region128: #{tpu_custom_call.1} parent=121 // loop_footer_branch
                %388 = sbr.rel target = $region124
              $region129: #{tpu_custom_call.1} parent=121 // loop_exit
                _
            $region122: #{tpu_custom_call.1} parent=113 // pred_fallthru
              _
          $region114: #{tpu_custom_call.1} parent=109 // pred_fallthru
            _
          %432 = vnop
        $region110: #{tpu_custom_call.1} parent=23 // pred_fallthru
          _
        // Predicated region
        $region148: #{tpu_custom_call.1} parent=23 // pred_check
          %p433 = pneg %p140
        $region149: #{tpu_custom_call.1} parent=23 // pred_check_branch
          %435 = sbr.rel (%p433) target = $region151
        $region150: #{tpu_custom_call.1} parent=23 // pred_region
          %p436 = scmp.lt.s32.totalorder %s22, 1
          %s437 = scalar_select %p436, %s22, 1
          %p438 = scmp.lt.s32.totalorder %s23, 2
          %s439 = scalar_select %p438, %s23, 2
          %s440 = smul.addr %s437, 3
          %s441 = sadd.s32 %s439, %s440
          %s442 = smul.addr %s441, 8
          %s443 = scalar_lea.vmem %s3, %s442
        $region151: #{tpu_custom_call.1} parent=23 // pred_fallthru
          _
      $region24: #{tpu_custom_call.1} parent=5 // pred_fallthru
        _
      %p444 = scmp.le.s32.totalorder 1, %s15
      %p445 = scmp.lt.s32.totalorder %s15, 19
      %p446 = pnand %p444, %p445
      %p447 = pneg %p446
      // Predicated region
      $region152: #{tpu_custom_call.1} parent=5 // pred_check
        _
      $region153: #{tpu_custom_call.1} parent=5 // pred_check_branch
        %449 = sbr.rel (%p446) target = $region155
      $region154: #{tpu_custom_call.1} parent=5 // pred_region
        %s450 = ssub.s32 %s15, 1
        %s451 = sand.u32 %s49, 1
        %s452 = sand.u32 %s49, 1
        %s453 = smul.addr %s452, 16
        %s454 = scalar_lea.vmem [#allocation5], %s453
        // Predicated region
        $region156: #{tpu_custom_call.1} parent=154 // pred_check
          %p455 = pneg %p62
        $region157: #{tpu_custom_call.1} parent=154 // pred_check_branch
          %457 = sbr.rel (%p455) target = $region159
        $region158: #{tpu_custom_call.1} parent=154 // pred_region
          _
        $region159: #{tpu_custom_call.1} parent=154 // pred_fallthru
          _
        %s458 = sand.u32 %s77, 1
        %s459 = sand.u32 %s77, 1
        %s460 = smul.addr %s459, 16
        %s461 = scalar_lea.vmem [#allocation6], %s460
        // Predicated region
        $region160: #{tpu_custom_call.1} parent=154 // pred_check
          %p462 = pneg %p90
        $region161: #{tpu_custom_call.1} parent=154 // pred_check_branch
          %464 = sbr.rel (%p462) target = $region163
        $region162: #{tpu_custom_call.1} parent=154 // pred_region
          _
        $region163: #{tpu_custom_call.1} parent=154 // pred_fallthru
          _
        %s465 = sand.u32 %s105, 1
        %s466 = sand.u32 %s105, 1
        %s467 = smul.addr %s466, 16
        %s468 = scalar_lea.vmem [#allocation7], %s467
        // Predicated region
        $region164: #{tpu_custom_call.1} parent=154 // pred_check
          %p469 = pneg %p118
        $region165: #{tpu_custom_call.1} parent=154 // pred_check_branch
          %471 = sbr.rel (%p469) target = $region167
        $region166: #{tpu_custom_call.1} parent=154 // pred_region
          _
        $region167: #{tpu_custom_call.1} parent=154 // pred_fallthru
          _
        %s472 = sand.u32 %s49, 1
        %s473 = sand.u32 %s49, 1
        %s474 = smul.addr %s473, 16
        %s475 = scalar_lea.vmem [#allocation5], %s474
        %p476 = pneg %p62
        %p477 = pneg %p59
        %s478 = sand.u32 %s77, 1
        %s479 = sand.u32 %s77, 1
        %s480 = smul.addr %s479, 16
        %s481 = scalar_lea.vmem [#allocation6], %s480
        %p482 = pneg %p90
        %p483 = pneg %p87
        %s484 = sand.u32 %s105, 1
        %s485 = sand.u32 %s105, 1
        %s486 = smul.addr %s485, 16
        %s487 = scalar_lea.vmem [#allocation7], %s486
        %p488 = pneg %p118
        %p489 = pneg %p115
        %p490 = scmp.lt.s32.totalorder %s25, 1
        %s491 = scalar_select %p490, %s25, 1
        %p492 = scmp.lt.s32.totalorder %s26, 2
        %s493 = scalar_select %p492, %s26, 2
        %s494 = smul.addr %s491, 3
        %s495 = sadd.s32 %s493, %s494
        %s496 = smul.addr %s495, 8
        %s497 = scalar_lea.vmem %s3, %s496
        %p498 = pneg %p146
        %p499 = pneg %p143
        %p500 = pneg %p167
        %p501 = pneg %p164
        %p502 = pneg %p188
        %p503 = pneg %p185
        %p504 = pneg %p216
        %p505 = pneg %p213
        %s506 = sand.u32 %s203, 1
        %s507 = scalar_lea.sflag [#allocation9], %s506
        %s508 = sand.u32 %s203, 1
        %s509 = smul.addr %s508, 8
        %s510 = scalar_lea.vmem [#allocation8], %s509
        %p511 = scmp.lt.s32.totalorder %s25, 1
        %s512 = scalar_select %p511, %s25, 1
        %p513 = scmp.lt.s32.totalorder %s26, 2
        %s514 = scalar_select %p513, %s26, 2
        %s515 = smul.addr %s512, 3
        %s516 = sadd.s32 %s514, %s515
        %s517 = smul.addr %s516, 8
        %s518 = scalar_lea.vmem %s3, %s517
        %p520 = scmp.eq.s32.totalorder %s27, 0
        // Predicated region
        $region168: #{tpu_custom_call.1} parent=154 // pred_check
          %p521 = pneg %p520
        $region169: #{tpu_custom_call.1} parent=154 // pred_check_branch
          %523 = sbr.rel (%p521) target = $region171
        $region170: #{tpu_custom_call.1} parent=154 // pred_region
          %vm524 = vcmask 7168
          %525 = vst.msk [vmem:[#allocation2] sm:$0xff] %vm524, -inf
          %526 = vst.msk [vmem:[#allocation2 + $0x8] sm:$0xff] %vm524, -inf
          %527 = vst.msk [vmem:[#allocation2 + $0x10] sm:$0xff] %vm524, -inf
          %528 = vst.msk [vmem:[#allocation2 + $0x18] sm:$0xff] %vm524, -inf
          %529 = vst.msk [vmem:[#allocation3] sm:$0xff] %vm524, 0.0
          %530 = vst.msk [vmem:[#allocation3 + $0x8] sm:$0xff] %vm524, 0.0
          %531 = vst.msk [vmem:[#allocation3 + $0x10] sm:$0xff] %vm524, 0.0
          %532 = vst.msk [vmem:[#allocation3 + $0x18] sm:$0xff] %vm524, 0.0
          %vm533 = vcmask 64512
          %534 = vst.msk [vmem:[#allocation4] sm:$0xff] %vm533, 0.0
          %535 = vst.msk [vmem:[#allocation4 + $0x8] sm:$0xff] %vm533, 0.0
          %536 = vst.msk [vmem:[#allocation4 + $0x10] sm:$0xff] %vm533, 0.0
          %537 = vst.msk [vmem:[#allocation4 + $0x18] sm:$0xff] %vm533, 0.0
        $region171: #{tpu_custom_call.1} parent=154 // pred_fallthru
          _
        %v538 = vld [vmem:[%s454] sm:$0xf]
        %v539 = vld [vmem:[%s454 + $0x4] sm:$0xf]
        %v540 = vld [vmem:[%s454 + $0x8] sm:$0xf]
        %v541 = vld [vmem:[%s454 + $0xc] sm:$0xf]
        %v542 = vld [vmem:[%s461] sm:$0xf]
        %v543 = vld [vmem:[%s461 + $0x4] sm:$0xf]
        %v544 = vld [vmem:[%s461 + $0x8] sm:$0xf]
        %v545 = vld [vmem:[%s461 + $0xc] sm:$0xf]
        %v546 = vld [vmem:[%s468] sm:$0xf]
        %v547 = vld [vmem:[%s468 + $0x4] sm:$0xf]
        %v548 = vld [vmem:[%s468 + $0x8] sm:$0xf]
        %v549 = vld [vmem:[%s468 + $0xc] sm:$0xf]
        %vm550 = vcmask 64512
        %v552 = vsel %vm550, %v538, 0
        %v555 = vsel %vm550, %v542, 0
        %557 = vmatprep.subr.bf16.mxu0 0
        %558 = vmatpush1.bf16.xpose.msra.mxu0 0
        %559 = vmatprep.subr.bf16.mxu0 0
        %560 = vmatpush1.bf16.xpose.msra.mxu0 0
        %561 = vmatprep.subr.bf16.mxu0 0
        %562 = vmatpush1.bf16.xpose.msra.mxu0 0
        %563 = vmatprep.subr.bf16.mxu0 0
        %564 = vmatpush1.bf16.xpose.msra.mxu0 0
        %565 = vmatprep.subr.bf16.mxu0 0
        %566 = vmatpush1.bf16.xpose.msra.mxu0 0
        %567 = vmatprep.subr.bf16.mxu0 0
        %568 = vmatpush1.bf16.xpose.msra.mxu0 0
        %569 = vmatprep.subr.bf16.mxu0 0
        %570 = vmatpush1.bf16.xpose.msra.mxu0 0
        %571 = vmatprep.subr.bf16.mxu0 0
        %572 = vmatpush1.bf16.xpose.msra.mxu0 %v555
        %573 = vmatprep.subr.bf16.mxu0 0
        %574 = vmatpush2.bf16.xpose.msra.mxu0 0
        %575 = vmatprep.subr.bf16.mxu0 0
        %576 = vmatpush2.bf16.xpose.msra.mxu0 0
        %577 = vmatprep.subr.bf16.mxu0 0
        %578 = vmatpush2.bf16.xpose.msra.mxu0 0
        %579 = vmatprep.subr.bf16.mxu0 0
        %580 = vmatpush2.bf16.xpose.msra.mxu0 0
        %581 = vmatprep.subr.bf16.mxu0 0
        %582 = vmatpush2.bf16.xpose.msra.mxu0 0
        %583 = vmatprep.subr.bf16.mxu0 0
        %584 = vmatpush2.bf16.xpose.msra.mxu0 0
        %585 = vmatprep.subr.bf16.mxu0 0
        %586 = vmatpush2.bf16.xpose.msra.mxu0 0
        %587 = vmatprep.subr.bf16.mxu0 0
        %588 = vmatpush2.bf16.xpose.msra.mxu0 0
        %589 = vmatprep.mubr.bf16.mxu0 0
        %590 = vmatmul.mubr.bf16.gmra.mxu0 %v552
        %v591 = vpop.f32.mrf.mxu0
        %v592 = vadd.f32 0.0, %v591
        %v593 = vpop.f32.mrf.mxu0
        %v594 = vpop.f32.mrf.mxu0
        %v595 = vpop.f32.mrf.mxu0
        %596 = vdwg.mxu0
        %v598 = vsel %vm550, %v539, 0
        %v601 = vsel %vm550, %v543, 0
        %603 = vmatprep.subr.bf16.mxu0 0
        %604 = vmatpush1.bf16.xpose.msra.mxu0 0
        %605 = vmatprep.subr.bf16.mxu0 0
        %606 = vmatpush1.bf16.xpose.msra.mxu0 0
        %607 = vmatprep.subr.bf16.mxu0 0
        %608 = vmatpush1.bf16.xpose.msra.mxu0 0
        %609 = vmatprep.subr.bf16.mxu0 0
        %610 = vmatpush1.bf16.xpose.msra.mxu0 0
        %611 = vmatprep.subr.bf16.mxu0 0
        %612 = vmatpush1.bf16.xpose.msra.mxu0 0
        %613 = vmatprep.subr.bf16.mxu0 0
        %614 = vmatpush1.bf16.xpose.msra.mxu0 0
        %615 = vmatprep.subr.bf16.mxu0 0
        %616 = vmatpush1.bf16.xpose.msra.mxu0 0
        %617 = vmatprep.subr.bf16.mxu0 0
        %618 = vmatpush1.bf16.xpose.msra.mxu0 %v601
        %619 = vmatprep.subr.bf16.mxu0 0
        %620 = vmatpush2.bf16.xpose.msra.mxu0 0
        %621 = vmatprep.subr.bf16.mxu0 0
        %622 = vmatpush2.bf16.xpose.msra.mxu0 0
        %623 = vmatprep.subr.bf16.mxu0 0
        %624 = vmatpush2.bf16.xpose.msra.mxu0 0
        %625 = vmatprep.subr.bf16.mxu0 0
        %626 = vmatpush2.bf16.xpose.msra.mxu0 0
        %627 = vmatprep.subr.bf16.mxu0 0
        %628 = vmatpush2.bf16.xpose.msra.mxu0 0
        %629 = vmatprep.subr.bf16.mxu0 0
        %630 = vmatpush2.bf16.xpose.msra.mxu0 0
        %631 = vmatprep.subr.bf16.mxu0 0
        %632 = vmatpush2.bf16.xpose.msra.mxu0 0
        %633 = vmatprep.subr.bf16.mxu0 0
        %634 = vmatpush2.bf16.xpose.msra.mxu0 0
        %635 = vmatprep.mubr.bf16.mxu0 0
        %636 = vmatmul.mubr.bf16.gmra.mxu0 %v598
        %v637 = vpop.f32.mrf.mxu0
        %v638 = vadd.f32 0.0, %v637
        %v639 = vpop.f32.mrf.mxu0
        %v640 = vpop.f32.mrf.mxu0
        %v641 = vpop.f32.mrf.mxu0
        %642 = vdwg.mxu0
        %v644 = vsel %vm550, %v540, 0
        %v647 = vsel %vm550, %v544, 0
        %649 = vmatprep.subr.bf16.mxu0 0
        %650 = vmatpush1.bf16.xpose.msra.mxu0 0
        %651 = vmatprep.subr.bf16.mxu0 0
        %652 = vmatpush1.bf16.xpose.msra.mxu0 0
        %653 = vmatprep.subr.bf16.mxu0 0
        %654 = vmatpush1.bf16.xpose.msra.mxu0 0
        %655 = vmatprep.subr.bf16.mxu0 0
        %656 = vmatpush1.bf16.xpose.msra.mxu0 0
        %657 = vmatprep.subr.bf16.mxu0 0
        %658 = vmatpush1.bf16.xpose.msra.mxu0 0
        %659 = vmatprep.subr.bf16.mxu0 0
        %660 = vmatpush1.bf16.xpose.msra.mxu0 0
        %661 = vmatprep.subr.bf16.mxu0 0
        %662 = vmatpush1.bf16.xpose.msra.mxu0 0
        %663 = vmatprep.subr.bf16.mxu0 0
        %664 = vmatpush1.bf16.xpose.msra.mxu0 %v647
        %665 = vmatprep.subr.bf16.mxu0 0
        %666 = vmatpush2.bf16.xpose.msra.mxu0 0
        %667 = vmatprep.subr.bf16.mxu0 0
        %668 = vmatpush2.bf16.xpose.msra.mxu0 0
        %669 = vmatprep.subr.bf16.mxu0 0
        %670 = vmatpush2.bf16.xpose.msra.mxu0 0
        %671 = vmatprep.subr.bf16.mxu0 0
        %672 = vmatpush2.bf16.xpose.msra.mxu0 0
        %673 = vmatprep.subr.bf16.mxu0 0
        %674 = vmatpush2.bf16.xpose.msra.mxu0 0
        %675 = vmatprep.subr.bf16.mxu0 0
        %676 = vmatpush2.bf16.xpose.msra.mxu0 0
        %677 = vmatprep.subr.bf16.mxu0 0
        %678 = vmatpush2.bf16.xpose.msra.mxu0 0
        %679 = vmatprep.subr.bf16.mxu0 0
        %680 = vmatpush2.bf16.xpose.msra.mxu0 0
        %681 = vmatprep.mubr.bf16.mxu0 0
        %682 = vmatmul.mubr.bf16.gmra.mxu0 %v644
        %v683 = vpop.f32.mrf.mxu0
        %v684 = vadd.f32 0.0, %v683
        %v685 = vpop.f32.mrf.mxu0
        %v686 = vpop.f32.mrf.mxu0
        %v687 = vpop.f32.mrf.mxu0
        %688 = vdwg.mxu0
        %v690 = vsel %vm550, %v541, 0
        %v693 = vsel %vm550, %v545, 0
        %695 = vmatprep.subr.bf16.mxu0 0
        %696 = vmatpush1.bf16.xpose.msra.mxu0 0
        %697 = vmatprep.subr.bf16.mxu0 0
        %698 = vmatpush1.bf16.xpose.msra.mxu0 0
        %699 = vmatprep.subr.bf16.mxu0 0
        %700 = vmatpush1.bf16.xpose.msra.mxu0 0
        %701 = vmatprep.subr.bf16.mxu0 0
        %702 = vmatpush1.bf16.xpose.msra.mxu0 0
        %703 = vmatprep.subr.bf16.mxu0 0
        %704 = vmatpush1.bf16.xpose.msra.mxu0 0
        %705 = vmatprep.subr.bf16.mxu0 0
        %706 = vmatpush1.bf16.xpose.msra.mxu0 0
        %707 = vmatprep.subr.bf16.mxu0 0
        %708 = vmatpush1.bf16.xpose.msra.mxu0 0
        %709 = vmatprep.subr.bf16.mxu0 0
        %710 = vmatpush1.bf16.xpose.msra.mxu0 %v693
        %711 = vmatprep.subr.bf16.mxu0 0
        %712 = vmatpush2.bf16.xpose.msra.mxu0 0
        %713 = vmatprep.subr.bf16.mxu0 0
        %714 = vmatpush2.bf16.xpose.msra.mxu0 0
        %715 = vmatprep.subr.bf16.mxu0 0
        %716 = vmatpush2.bf16.xpose.msra.mxu0 0
        %717 = vmatprep.subr.bf16.mxu0 0
        %718 = vmatpush2.bf16.xpose.msra.mxu0 0
        %719 = vmatprep.subr.bf16.mxu0 0
        %720 = vmatpush2.bf16.xpose.msra.mxu0 0
        %721 = vmatprep.subr.bf16.mxu0 0
        %722 = vmatpush2.bf16.xpose.msra.mxu0 0
        %723 = vmatprep.subr.bf16.mxu0 0
        %724 = vmatpush2.bf16.xpose.msra.mxu0 0
        %725 = vmatprep.subr.bf16.mxu0 0
        %726 = vmatpush2.bf16.xpose.msra.mxu0 0
        %727 = vmatprep.mubr.bf16.mxu0 0
        %728 = vmatmul.mubr.bf16.gmra.mxu0 %v690
        %v729 = vpop.f32.mrf.mxu0
        %v730 = vadd.f32 0.0, %v729
        %v731 = vpop.f32.mrf.mxu0
        %v732 = vpop.f32.mrf.mxu0
        %v733 = vpop.f32.mrf.mxu0
        %734 = vdwg.mxu0
        %s735 = smul.u32 %s27, 8
        %v736 = vlaneseq
        %v737 = vand.u32 %v736, 127
        %v738 = vstv %s735
        %v739 = vadd.s32 %v738, %v737
        %vm740 = vcmp.lt.s32.totalorder %v739, 20
        %v741 = vsel %vm740, %v592, -1e+30
        %v742 = vsel %vm740, %v638, -1e+30
        %v743 = vsel %vm740, %v684, -1e+30
        %v744 = vsel %vm740, %v730, -1e+30
        %v745 = vld [vmem:[#allocation2] sm:$0xff]
        %v746 = vld [vmem:[#allocation2 + $0x8] sm:$0xff]
        %v747 = vld [vmem:[#allocation2 + $0x10] sm:$0xff]
        %v748 = vld [vmem:[#allocation2 + $0x18] sm:$0xff]
        %v749 = vsel %vm550, %v741, -inf
        %750 = vmax.xlane.f32.xlu0 %v749
        %v751 = vpop.xlane.xlu0 %750
        %v752 = vsel %vm550, %v742, -inf
        %753 = vmax.xlane.f32.xlu0 %v752
        %v754 = vpop.xlane.xlu0 %753
        %v755 = vsel %vm550, %v743, -inf
        %756 = vmax.xlane.f32.xlu0 %v755
        %v757 = vpop.xlane.xlu0 %756
        %v758 = vsel %vm550, %v744, -inf
        %759 = vmax.xlane.f32.xlu0 %v758
        %v760 = vpop.xlane.xlu0 %759
        %v761 = vmax.f32 %v745, %v751
        %v762 = vmax.f32 %v746, %v754
        %v763 = vmax.f32 %v747, %v757
        %v764 = vmax.f32 %v748, %v760
        %v765 = vsub.f32 %v745, %v761
        %v766 = vsub.f32 %v746, %v762
        %v767 = vsub.f32 %v747, %v763
        %v768 = vsub.f32 %v748, %v764
        %v769 = vmul.f32 %v765, 1.442695
        %v770 = vpow.pop %v769
        %v771 = vmul.f32 %v766, 1.442695
        %v772 = vpow.pop %v771
        %v773 = vmul.f32 %v767, 1.442695
        %v774 = vpow.pop %v773
        %v775 = vmul.f32 %v768, 1.442695
        %v776 = vpow.pop %v775
        %778 = vset.pattern.permute.xlu0 0
        %779 = vperm.xlu0 %778, %v761
        %v780 = vpop.permute.xlu0 %779
        %783 = vset.pattern.permute.xlu0 0
        %784 = vperm.xlu0 %783, %v762
        %v785 = vpop.permute.xlu0 %784
        %788 = vset.pattern.permute.xlu0 0
        %789 = vperm.xlu0 %788, %v763
        %v790 = vpop.permute.xlu0 %789
        %793 = vset.pattern.permute.xlu0 0
        %794 = vperm.xlu0 %793, %v764
        %v795 = vpop.permute.xlu0 %794
        %v797 = vsub.f32 %v741, %v780
        %v798 = vsub.f32 %v742, %v785
        %v799 = vsub.f32 %v743, %v790
        %v800 = vsub.f32 %v744, %v795
        %v801 = vmul.f32 %v797, 1.442695
        %v802 = vpow.pop %v801
        %v803 = vmul.f32 %v798, 1.442695
        %v804 = vpow.pop %v803
        %v805 = vmul.f32 %v799, 1.442695
        %v806 = vpow.pop %v805
        %v807 = vmul.f32 %v800, 1.442695
        %v808 = vpow.pop %v807
        %v809 = vld [vmem:[#allocation3] sm:$0xff]
        %v810 = vld [vmem:[#allocation3 + $0x8] sm:$0xff]
        %v811 = vld [vmem:[#allocation3 + $0x10] sm:$0xff]
        %v812 = vld [vmem:[#allocation3 + $0x18] sm:$0xff]
        %v813 = vmul.f32 %v770, %v809
        %v814 = vmul.f32 %v772, %v810
        %v815 = vmul.f32 %v774, %v811
        %v816 = vmul.f32 %v776, %v812
        %v817 = vsel %vm550, %v802, 0.0
        %818 = vadd.xlane.f32.xlu0 %v817
        %v819 = vpop.xlane.xlu0 %818
        %v820 = vsel %vm550, %v804, 0.0
        %821 = vadd.xlane.f32.xlu0 %v820
        %v822 = vpop.xlane.xlu0 %821
        %v823 = vsel %vm550, %v806, 0.0
        %824 = vadd.xlane.f32.xlu0 %v823
        %v825 = vpop.xlane.xlu0 %824
        %v826 = vsel %vm550, %v808, 0.0
        %827 = vadd.xlane.f32.xlu0 %v826
        %v828 = vpop.xlane.xlu0 %827
        %v829 = vadd.f32 %v813, %v819
        %v830 = vadd.f32 %v814, %v822
        %v831 = vadd.f32 %v815, %v825
        %v832 = vadd.f32 %v816, %v828
        %vm833 = vcmask 7168
        %834 = vst.msk [vmem:[#allocation3] sm:$0xff] %vm833, %v829
        %835 = vst.msk [vmem:[#allocation3 + $0x8] sm:$0xff] %vm833, %v830
        %836 = vst.msk [vmem:[#allocation3 + $0x10] sm:$0xff] %vm833, %v831
        %837 = vst.msk [vmem:[#allocation3 + $0x18] sm:$0xff] %vm833, %v832
        %v838 = vld [vmem:[#allocation4] sm:$0xff]
        %v839 = vld [vmem:[#allocation4 + $0x8] sm:$0xff]
        %v840 = vld [vmem:[#allocation4 + $0x10] sm:$0xff]
        %v841 = vld [vmem:[#allocation4 + $0x18] sm:$0xff]
        %843 = vset.pattern.permute.xlu0 0
        %844 = vperm.xlu0 %843, %v770
        %v845 = vpop.permute.xlu0 %844
        %848 = vset.pattern.permute.xlu0 0
        %849 = vperm.xlu0 %848, %v772
        %v850 = vpop.permute.xlu0 %849
        %853 = vset.pattern.permute.xlu0 0
        %854 = vperm.xlu0 %853, %v774
        %v855 = vpop.permute.xlu0 %854
        %858 = vset.pattern.permute.xlu0 0
        %859 = vperm.xlu0 %858, %v776
        %v860 = vpop.permute.xlu0 %859
        %v862 = vmul.f32 %v845, %v838
        %v863 = vmul.f32 %v850, %v839
        %v864 = vmul.f32 %v855, %v840
        %v865 = vmul.f32 %v860, %v841
        %v866 = vpack.c.bf16 %v802, %v802
        %v867 = vpack.c.bf16 %v804, %v804
        %v868 = vpack.c.bf16 %v806, %v806
        %v869 = vpack.c.bf16 %v808, %v808
        %v871 = vsel %vm550, %v866, 0
        %vm873 = vcmask 1043456
        %v875 = vsel %vm873, %v546, 0
        %877 = vmatprep.subr.bf16.mxu0 0
        %878 = vmatpush1.bf16.msra.mxu0 0
        %879 = vmatprep.subr.bf16.mxu0 0
        %880 = vmatpush1.bf16.msra.mxu0 0
        %881 = vmatprep.subr.bf16.mxu0 0
        %882 = vmatpush1.bf16.msra.mxu0 0
        %883 = vmatprep.subr.bf16.mxu0 0
        %884 = vmatpush1.bf16.msra.mxu0 0
        %885 = vmatprep.subr.bf16.mxu0 0
        %886 = vmatpush1.bf16.msra.mxu0 0
        %887 = vmatprep.subr.bf16.mxu0 0
        %888 = vmatpush1.bf16.msra.mxu0 0
        %889 = vmatprep.subr.bf16.mxu0 0
        %890 = vmatpush1.bf16.msra.mxu0 0
        %891 = vmatprep.subr.bf16.mxu0 0
        %892 = vmatpush1.bf16.msra.mxu0 %v875
        %893 = vmatprep.subr.bf16.mxu0 0
        %894 = vmatpush2.bf16.msra.mxu0 0
        %895 = vmatprep.subr.bf16.mxu0 0
        %896 = vmatpush2.bf16.msra.mxu0 0
        %897 = vmatprep.subr.bf16.mxu0 0
        %898 = vmatpush2.bf16.msra.mxu0 0
        %899 = vmatprep.subr.bf16.mxu0 0
        %900 = vmatpush2.bf16.msra.mxu0 0
        %901 = vmatprep.subr.bf16.mxu0 0
        %902 = vmatpush2.bf16.msra.mxu0 0
        %903 = vmatprep.subr.bf16.mxu0 0
        %904 = vmatpush2.bf16.msra.mxu0 0
        %905 = vmatprep.subr.bf16.mxu0 0
        %906 = vmatpush2.bf16.msra.mxu0 0
        %907 = vmatprep.subr.bf16.mxu0 0
        %908 = vmatpush2.bf16.msra.mxu0 0
        %909 = vmatprep.mubr.bf16.mxu0 0
        %910 = vmatmul.mubr.bf16.gmra.mxu0 %v871
        %v911 = vpop.f32.mrf.mxu0
        %v912 = vadd.f32 0.0, %v911
        %v913 = vpop.f32.mrf.mxu0
        %v914 = vpop.f32.mrf.mxu0
        %v915 = vpop.f32.mrf.mxu0
        %916 = vdwg.mxu0
        %v918 = vsel %vm550, %v867, 0
        %v921 = vsel %vm873, %v547, 0
        %923 = vmatprep.subr.bf16.mxu0 0
        %924 = vmatpush1.bf16.msra.mxu0 0
        %925 = vmatprep.subr.bf16.mxu0 0
        %926 = vmatpush1.bf16.msra.mxu0 0
        %927 = vmatprep.subr.bf16.mxu0 0
        %928 = vmatpush1.bf16.msra.mxu0 0
        %929 = vmatprep.subr.bf16.mxu0 0
        %930 = vmatpush1.bf16.msra.mxu0 0
        %931 = vmatprep.subr.bf16.mxu0 0
        %932 = vmatpush1.bf16.msra.mxu0 0
        %933 = vmatprep.subr.bf16.mxu0 0
        %934 = vmatpush1.bf16.msra.mxu0 0
        %935 = vmatprep.subr.bf16.mxu0 0
        %936 = vmatpush1.bf16.msra.mxu0 0
        %937 = vmatprep.subr.bf16.mxu0 0
        %938 = vmatpush1.bf16.msra.mxu0 %v921
        %939 = vmatprep.subr.bf16.mxu0 0
        %940 = vmatpush2.bf16.msra.mxu0 0
        %941 = vmatprep.subr.bf16.mxu0 0
        %942 = vmatpush2.bf16.msra.mxu0 0
        %943 = vmatprep.subr.bf16.mxu0 0
        %944 = vmatpush2.bf16.msra.mxu0 0
        %945 = vmatprep.subr.bf16.mxu0 0
        %946 = vmatpush2.bf16.msra.mxu0 0
        %947 = vmatprep.subr.bf16.mxu0 0
        %948 = vmatpush2.bf16.msra.mxu0 0
        %949 = vmatprep.subr.bf16.mxu0 0
        %950 = vmatpush2.bf16.msra.mxu0 0
        %951 = vmatprep.subr.bf16.mxu0 0
        %952 = vmatpush2.bf16.msra.mxu0 0
        %953 = vmatprep.subr.bf16.mxu0 0
        %954 = vmatpush2.bf16.msra.mxu0 0
        %955 = vmatprep.mubr.bf16.mxu0 0
        %956 = vmatmul.mubr.bf16.gmra.mxu0 %v918
        %v957 = vpop.f32.mrf.mxu0
        %v958 = vadd.f32 0.0, %v957
        %v959 = vpop.f32.mrf.mxu0
        %v960 = vpop.f32.mrf.mxu0
        %v961 = vpop.f32.mrf.mxu0
        %962 = vdwg.mxu0
        %v964 = vsel %vm550, %v868, 0
        %v967 = vsel %vm873, %v548, 0
        %969 = vmatprep.subr.bf16.mxu0 0
        %970 = vmatpush1.bf16.msra.mxu0 0
        %971 = vmatprep.subr.bf16.mxu0 0
        %972 = vmatpush1.bf16.msra.mxu0 0
        %973 = vmatprep.subr.bf16.mxu0 0
        %974 = vmatpush1.bf16.msra.mxu0 0
        %975 = vmatprep.subr.bf16.mxu0 0
        %976 = vmatpush1.bf16.msra.mxu0 0
        %977 = vmatprep.subr.bf16.mxu0 0
        %978 = vmatpush1.bf16.msra.mxu0 0
        %979 = vmatprep.subr.bf16.mxu0 0
        %980 = vmatpush1.bf16.msra.mxu0 0
        %981 = vmatprep.subr.bf16.mxu0 0
        %982 = vmatpush1.bf16.msra.mxu0 0
        %983 = vmatprep.subr.bf16.mxu0 0
        %984 = vmatpush1.bf16.msra.mxu0 %v967
        %985 = vmatprep.subr.bf16.mxu0 0
        %986 = vmatpush2.bf16.msra.mxu0 0
        %987 = vmatprep.subr.bf16.mxu0 0
        %988 = vmatpush2.bf16.msra.mxu0 0
        %989 = vmatprep.subr.bf16.mxu0 0
        %990 = vmatpush2.bf16.msra.mxu0 0
        %991 = vmatprep.subr.bf16.mxu0 0
        %992 = vmatpush2.bf16.msra.mxu0 0
        %993 = vmatprep.subr.bf16.mxu0 0
        %994 = vmatpush2.bf16.msra.mxu0 0
        %995 = vmatprep.subr.bf16.mxu0 0
        %996 = vmatpush2.bf16.msra.mxu0 0
        %997 = vmatprep.subr.bf16.mxu0 0
        %998 = vmatpush2.bf16.msra.mxu0 0
        %999 = vmatprep.subr.bf16.mxu0 0
        %1000 = vmatpush2.bf16.msra.mxu0 0
        %1001 = vmatprep.mubr.bf16.mxu0 0
        %1002 = vmatmul.mubr.bf16.gmra.mxu0 %v964
        %v1003 = vpop.f32.mrf.mxu0
        %v1004 = vadd.f32 0.0, %v1003
        %v1005 = vpop.f32.mrf.mxu0
        %v1006 = vpop.f32.mrf.mxu0
        %v1007 = vpop.f32.mrf.mxu0
        %1008 = vdwg.mxu0
        %v1010 = vsel %vm550, %v869, 0
        %v1013 = vsel %vm873, %v549, 0
        %1015 = vmatprep.subr.bf16.mxu0 0
        %1016 = vmatpush1.bf16.msra.mxu0 0
        %1017 = vmatprep.subr.bf16.mxu0 0
        %1018 = vmatpush1.bf16.msra.mxu0 0
        %1019 = vmatprep.subr.bf16.mxu0 0
        %1020 = vmatpush1.bf16.msra.mxu0 0
        %1021 = vmatprep.subr.bf16.mxu0 0
        %1022 = vmatpush1.bf16.msra.mxu0 0
        %1023 = vmatprep.subr.bf16.mxu0 0
        %1024 = vmatpush1.bf16.msra.mxu0 0
        %1025 = vmatprep.subr.bf16.mxu0 0
        %1026 = vmatpush1.bf16.msra.mxu0 0
        %1027 = vmatprep.subr.bf16.mxu0 0
        %1028 = vmatpush1.bf16.msra.mxu0 0
        %1029 = vmatprep.subr.bf16.mxu0 0
        %1030 = vmatpush1.bf16.msra.mxu0 %v1013
        %1031 = vmatprep.subr.bf16.mxu0 0
        %1032 = vmatpush2.bf16.msra.mxu0 0
        %1033 = vmatprep.subr.bf16.mxu0 0
        %1034 = vmatpush2.bf16.msra.mxu0 0
        %1035 = vmatprep.subr.bf16.mxu0 0
        %1036 = vmatpush2.bf16.msra.mxu0 0
        %1037 = vmatprep.subr.bf16.mxu0 0
        %1038 = vmatpush2.bf16.msra.mxu0 0
        %1039 = vmatprep.subr.bf16.mxu0 0
        %1040 = vmatpush2.bf16.msra.mxu0 0
        %1041 = vmatprep.subr.bf16.mxu0 0
        %1042 = vmatpush2.bf16.msra.mxu0 0
        %1043 = vmatprep.subr.bf16.mxu0 0
        %1044 = vmatpush2.bf16.msra.mxu0 0
        %1045 = vmatprep.subr.bf16.mxu0 0
        %1046 = vmatpush2.bf16.msra.mxu0 0
        %1047 = vmatprep.mubr.bf16.mxu0 0
        %1048 = vmatmul.mubr.bf16.gmra.mxu0 %v1010
        %v1049 = vpop.f32.mrf.mxu0
        %v1050 = vadd.f32 0.0, %v1049
        %v1051 = vpop.f32.mrf.mxu0
        %v1052 = vpop.f32.mrf.mxu0
        %v1053 = vpop.f32.mrf.mxu0
        %1054 = vdwg.mxu0
        %v1055 = vadd.f32 %v862, %v912
        %v1056 = vadd.f32 %v863, %v958
        %v1057 = vadd.f32 %v864, %v1004
        %v1058 = vadd.f32 %v865, %v1050
        %1059 = vst.msk [vmem:[#allocation4] sm:$0xff] %vm550, %v1055
        %1060 = vst.msk [vmem:[#allocation4 + $0x8] sm:$0xff] %vm550, %v1056
        %1061 = vst.msk [vmem:[#allocation4 + $0x10] sm:$0xff] %vm550, %v1057
        %1062 = vst.msk [vmem:[#allocation4 + $0x18] sm:$0xff] %vm550, %v1058
        %1063 = vst.msk [vmem:[#allocation2] sm:$0xff] %vm833, %v761
        %1064 = vst.msk [vmem:[#allocation2 + $0x8] sm:$0xff] %vm833, %v762
        %1065 = vst.msk [vmem:[#allocation2 + $0x10] sm:$0xff] %vm833, %v763
        %1066 = vst.msk [vmem:[#allocation2 + $0x18] sm:$0xff] %vm833, %v764
        %p1067 = scmp.eq.s32.totalorder %s27, 2
        // Predicated region
        $region172: #{tpu_custom_call.1} parent=154 // pred_check
          %p1068 = pneg %p1067
        $region173: #{tpu_custom_call.1} parent=154 // pred_check_branch
          %1070 = sbr.rel (%p1068) target = $region175
        $region174: #{tpu_custom_call.1} parent=154 // pred_region
          %v1071 = vld [vmem:[#allocation3] sm:$0xff]
          %v1072 = vld [vmem:[#allocation3 + $0x8] sm:$0xff]
          %v1073 = vld [vmem:[#allocation3 + $0x10] sm:$0xff]
          %v1074 = vld [vmem:[#allocation3 + $0x18] sm:$0xff]
          %v1075 = vrcp.pop %v1071
          %v1076 = vrcp.pop %v1072
          %v1077 = vrcp.pop %v1073
          %v1078 = vrcp.pop %v1074
          %v1079 = vld [vmem:[#allocation4] sm:$0xff]
          %v1080 = vld [vmem:[#allocation4 + $0x8] sm:$0xff]
          %v1081 = vld [vmem:[#allocation4 + $0x10] sm:$0xff]
          %v1082 = vld [vmem:[#allocation4 + $0x18] sm:$0xff]
          %1084 = vset.pattern.permute.xlu0 0
          %1085 = vperm.xlu0 %1084, %v1075
          %v1086 = vpop.permute.xlu0 %1085
          %1089 = vset.pattern.permute.xlu0 0
          %1090 = vperm.xlu0 %1089, %v1076
          %v1091 = vpop.permute.xlu0 %1090
          %1094 = vset.pattern.permute.xlu0 0
          %1095 = vperm.xlu0 %1094, %v1077
          %v1096 = vpop.permute.xlu0 %1095
          %1099 = vset.pattern.permute.xlu0 0
          %1100 = vperm.xlu0 %1099, %v1078
          %v1101 = vpop.permute.xlu0 %1100
          %v1103 = vmul.f32 %v1079, %v1086
          %v1104 = vmul.f32 %v1080, %v1091
          %v1105 = vmul.f32 %v1081, %v1096
          %v1106 = vmul.f32 %v1082, %v1101
          %v1107 = vpack.c.bf16 %v1103, %v1103
          %v1108 = vpack.c.bf16 %v1104, %v1104
          %v1109 = vpack.c.bf16 %v1105, %v1105
          %v1110 = vpack.c.bf16 %v1106, %v1106
          %v1111 = vld [vmem:[%s4] sm:$0xf]
          %s1112 = scalar_lea.vmem %s4, 4
          %v1113 = vld [vmem:[%s1112] sm:$0xf]
          %v1115 = vsel %vm550, %v1108, 0
          %v1118 = vsel %vm873, %v1113, 0
          %1120 = vmatprep.subr.bf16.mxu0 0
          %1121 = vmatpush1.bf16.msra.mxu0 0
          %1122 = vmatprep.subr.bf16.mxu0 0
          %1123 = vmatpush1.bf16.msra.mxu0 0
          %1124 = vmatprep.subr.bf16.mxu0 0
          %1125 = vmatpush1.bf16.msra.mxu0 0
          %1126 = vmatprep.subr.bf16.mxu0 0
          %1127 = vmatpush1.bf16.msra.mxu0 0
          %1128 = vmatprep.subr.bf16.mxu0 0
          %1129 = vmatpush1.bf16.msra.mxu0 0
          %1130 = vmatprep.subr.bf16.mxu0 0
          %1131 = vmatpush1.bf16.msra.mxu0 0
          %1132 = vmatprep.subr.bf16.mxu0 0
          %1133 = vmatpush1.bf16.msra.mxu0 0
          %1134 = vmatprep.subr.bf16.mxu0 0
          %1135 = vmatpush1.bf16.msra.mxu0 %v1118
          %1136 = vmatprep.subr.bf16.mxu0 0
          %1137 = vmatpush2.bf16.msra.mxu0 0
          %1138 = vmatprep.subr.bf16.mxu0 0
          %1139 = vmatpush2.bf16.msra.mxu0 0
          %1140 = vmatprep.subr.bf16.mxu0 0
          %1141 = vmatpush2.bf16.msra.mxu0 0
          %1142 = vmatprep.subr.bf16.mxu0 0
          %1143 = vmatpush2.bf16.msra.mxu0 0
          %1144 = vmatprep.subr.bf16.mxu0 0
          %1145 = vmatpush2.bf16.msra.mxu0 0
          %1146 = vmatprep.subr.bf16.mxu0 0
          %1147 = vmatpush2.bf16.msra.mxu0 0
          %1148 = vmatprep.subr.bf16.mxu0 0
          %1149 = vmatpush2.bf16.msra.mxu0 0
          %1150 = vmatprep.subr.bf16.mxu0 0
          %1151 = vmatpush2.bf16.msra.mxu0 0
          %1152 = vmatprep.mubr.bf16.mxu0 0
          %1153 = vmatmul.mubr.bf16.gmra.mxu0 %v1115
          %v1154 = vpop.f32.mrf.mxu0
          %v1155 = vadd.f32 0.0, %v1154
          %v1156 = vpop.f32.mrf.mxu0
          %v1157 = vpop.f32.mrf.mxu0
          %v1158 = vpop.f32.mrf.mxu0
          %1159 = vdwg.mxu0
          %v1161 = vsel %vm550, %v1107, 0
          %v1164 = vsel %vm873, %v1111, 0
          %1166 = vmatprep.subr.bf16.mxu0 0
          %1167 = vmatpush1.bf16.msra.mxu0 0
          %1168 = vmatprep.subr.bf16.mxu0 0
          %1169 = vmatpush1.bf16.msra.mxu0 0
          %1170 = vmatprep.subr.bf16.mxu0 0
          %1171 = vmatpush1.bf16.msra.mxu0 0
          %1172 = vmatprep.subr.bf16.mxu0 0
          %1173 = vmatpush1.bf16.msra.mxu0 0
          %1174 = vmatprep.subr.bf16.mxu0 0
          %1175 = vmatpush1.bf16.msra.mxu0 0
          %1176 = vmatprep.subr.bf16.mxu0 0
          %1177 = vmatpush1.bf16.msra.mxu0 0
          %1178 = vmatprep.subr.bf16.mxu0 0
          %1179 = vmatpush1.bf16.msra.mxu0 0
          %1180 = vmatprep.subr.bf16.mxu0 0
          %1181 = vmatpush1.bf16.msra.mxu0 %v1164
          %1182 = vmatprep.subr.bf16.mxu0 0
          %1183 = vmatpush2.bf16.msra.mxu0 0
          %1184 = vmatprep.subr.bf16.mxu0 0
          %1185 = vmatpush2.bf16.msra.mxu0 0
          %1186 = vmatprep.subr.bf16.mxu0 0
          %1187 = vmatpush2.bf16.msra.mxu0 0
          %1188 = vmatprep.subr.bf16.mxu0 0
          %1189 = vmatpush2.bf16.msra.mxu0 0
          %1190 = vmatprep.subr.bf16.mxu0 0
          %1191 = vmatpush2.bf16.msra.mxu0 0
          %1192 = vmatprep.subr.bf16.mxu0 0
          %1193 = vmatpush2.bf16.msra.mxu0 0
          %1194 = vmatprep.subr.bf16.mxu0 0
          %1195 = vmatpush2.bf16.msra.mxu0 0
          %1196 = vmatprep.subr.bf16.mxu0 0
          %1197 = vmatpush2.bf16.msra.mxu0 0
          %1198 = vmatprep.mubr.bf16.mxu0 0
          %1199 = vmatmul.mubr.bf16.gmra.mxu0 %v1161
          %v1200 = vpop.f32.mrf.mxu0
          %v1201 = vadd.f32 %v1155, %v1200
          %v1202 = vpop.f32.mrf.mxu0
          %v1203 = vpop.f32.mrf.mxu0
          %v1204 = vpop.f32.mrf.mxu0
          %1205 = vdwg.mxu0
          %s1206 = scalar_lea.vmem %s4, 8
          %v1207 = vld [vmem:[%s1206] sm:$0xf]
          %v1209 = vsel %vm550, %v1109, 0
          %v1212 = vsel %vm873, %v1207, 0
          %1214 = vmatprep.subr.bf16.mxu0 0
          %1215 = vmatpush1.bf16.msra.mxu0 0
          %1216 = vmatprep.subr.bf16.mxu0 0
          %1217 = vmatpush1.bf16.msra.mxu0 0
          %1218 = vmatprep.subr.bf16.mxu0 0
          %1219 = vmatpush1.bf16.msra.mxu0 0
          %1220 = vmatprep.subr.bf16.mxu0 0
          %1221 = vmatpush1.bf16.msra.mxu0 0
          %1222 = vmatprep.subr.bf16.mxu0 0
          %1223 = vmatpush1.bf16.msra.mxu0 0
          %1224 = vmatprep.subr.bf16.mxu0 0
          %1225 = vmatpush1.bf16.msra.mxu0 0
          %1226 = vmatprep.subr.bf16.mxu0 0
          %1227 = vmatpush1.bf16.msra.mxu0 0
          %1228 = vmatprep.subr.bf16.mxu0 0
          %1229 = vmatpush1.bf16.msra.mxu0 %v1212
          %1230 = vmatprep.subr.bf16.mxu0 0
          %1231 = vmatpush2.bf16.msra.mxu0 0
          %1232 = vmatprep.subr.bf16.mxu0 0
          %1233 = vmatpush2.bf16.msra.mxu0 0
          %1234 = vmatprep.subr.bf16.mxu0 0
          %1235 = vmatpush2.bf16.msra.mxu0 0
          %1236 = vmatprep.subr.bf16.mxu0 0
          %1237 = vmatpush2.bf16.msra.mxu0 0
          %1238 = vmatprep.subr.bf16.mxu0 0
          %1239 = vmatpush2.bf16.msra.mxu0 0
          %1240 = vmatprep.subr.bf16.mxu0 0
          %1241 = vmatpush2.bf16.msra.mxu0 0
          %1242 = vmatprep.subr.bf16.mxu0 0
          %1243 = vmatpush2.bf16.msra.mxu0 0
          %1244 = vmatprep.subr.bf16.mxu0 0
          %1245 = vmatpush2.bf16.msra.mxu0 0
          %1246 = vmatprep.mubr.bf16.mxu0 0
          %1247 = vmatmul.mubr.bf16.gmra.mxu0 %v1209
          %v1248 = vpop.f32.mrf.mxu0
          %v1249 = vadd.f32 0.0, %v1248
          %v1250 = vpop.f32.mrf.mxu0
          %v1251 = vpop.f32.mrf.mxu0
          %v1252 = vpop.f32.mrf.mxu0
          %1253 = vdwg.mxu0
          %v1254 = vadd.f32 %v1201, %v1249
          %s1255 = scalar_lea.vmem %s4, 12
          %v1256 = vld [vmem:[%s1255] sm:$0xf]
          %v1258 = vsel %vm550, %v1110, 0
          %v1261 = vsel %vm873, %v1256, 0
          %1263 = vmatprep.subr.bf16.mxu0 0
          %1264 = vmatpush1.bf16.msra.mxu0 0
          %1265 = vmatprep.subr.bf16.mxu0 0
          %1266 = vmatpush1.bf16.msra.mxu0 0
          %1267 = vmatprep.subr.bf16.mxu0 0
          %1268 = vmatpush1.bf16.msra.mxu0 0
          %1269 = vmatprep.subr.bf16.mxu0 0
          %1270 = vmatpush1.bf16.msra.mxu0 0
          %1271 = vmatprep.subr.bf16.mxu0 0
          %1272 = vmatpush1.bf16.msra.mxu0 0
          %1273 = vmatprep.subr.bf16.mxu0 0
          %1274 = vmatpush1.bf16.msra.mxu0 0
          %1275 = vmatprep.subr.bf16.mxu0 0
          %1276 = vmatpush1.bf16.msra.mxu0 0
          %1277 = vmatprep.subr.bf16.mxu0 0
          %1278 = vmatpush1.bf16.msra.mxu0 %v1261
          %1279 = vmatprep.subr.bf16.mxu0 0
          %1280 = vmatpush2.bf16.msra.mxu0 0
          %1281 = vmatprep.subr.bf16.mxu0 0
          %1282 = vmatpush2.bf16.msra.mxu0 0
          %1283 = vmatprep.subr.bf16.mxu0 0
          %1284 = vmatpush2.bf16.msra.mxu0 0
          %1285 = vmatprep.subr.bf16.mxu0 0
          %1286 = vmatpush2.bf16.msra.mxu0 0
          %1287 = vmatprep.subr.bf16.mxu0 0
          %1288 = vmatpush2.bf16.msra.mxu0 0
          %1289 = vmatprep.subr.bf16.mxu0 0
          %1290 = vmatpush2.bf16.msra.mxu0 0
          %1291 = vmatprep.subr.bf16.mxu0 0
          %1292 = vmatpush2.bf16.msra.mxu0 0
          %1293 = vmatprep.subr.bf16.mxu0 0
          %1294 = vmatpush2.bf16.msra.mxu0 0
          %1295 = vmatprep.mubr.bf16.mxu0 0
          %1296 = vmatmul.mubr.bf16.gmra.mxu0 %v1258
          %v1297 = vpop.f32.mrf.mxu0
          %v1298 = vadd.f32 0.0, %v1297
          %v1299 = vpop.f32.mrf.mxu0
          %v1300 = vpop.f32.mrf.mxu0
          %v1301 = vpop.f32.mrf.mxu0
          %1302 = vdwg.mxu0
          %v1303 = vadd.f32 %v1254, %v1298
          %v1304 = vld [vmem:[%s518] sm:$0xff]
          %v1305 = vadd.f32 %v1304, %v1303
          %v1306 = vld [vmem:[%s5] sm:$0x1]
          %v1308 = vlaneseq
          %v1309 = vshrl.u32 %v1308, 7
          %v1310 = vsub.s32 0, %v1309
          %v1311 = vrot.slane %v1306, %v1310
          %v1313 = vadd.f32 %v1305, %v1311
          %vm1314 = vcmask 261120
          %1315 = vst.msk [vmem:[%s510] sm:$0xff] %vm1314, %v1313
        $region175: #{tpu_custom_call.1} parent=154 // pred_fallthru
          _
        %s1316 = sand.u32 %s203, 1
        %s1317 = scalar_lea.sflag [#allocation9], %s1316
        %s1318 = sand.u32 %s203, 1
        %s1319 = smul.addr %s1318, 8
        %s1320 = scalar_lea.vmem [#allocation8], %s1319
        // Predicated region
        $region176: #{tpu_custom_call.1} parent=154 // pred_check
          %p1321 = pneg %p213
        $region177: #{tpu_custom_call.1} parent=154 // pred_check_branch
          %1323 = sbr.rel (%p1321) target = $region179
        $region178: #{tpu_custom_call.1} parent=154 // pred_region
          %s1325 = ssub.s32 128, 128
          %1326 = vsyncadd %s1317, %s1325
          %s1327 = smul.addr %s25, 3
          %s1328 = sadd.s32 %s26, %s1327
          %s1329 = smul.addr %s1328, 128
          %s1330 = scalar_lea.hbm %s6, %s1329
          %s1332 = sshll.u32 %s1320, 4
          %s1333 = int_to_ptr.vmem [resolvable:$true] %s1332
          %1335 = dma.vmem_to_hbm [thread:$0]  %s1333, 128, %s1330, %s1317
        $region179: #{tpu_custom_call.1} parent=154 // pred_fallthru
          _
      $region155: #{tpu_custom_call.1} parent=5 // pred_fallthru
        _
      %p1336 = scmp.le.s32.totalorder 2, %s15
      // Predicated region
      $region180: #{tpu_custom_call.1} parent=5 // pred_check
        %p1337 = pneg %p1336
      $region181: #{tpu_custom_call.1} parent=5 // pred_check_branch
        %1339 = sbr.rel (%p1337) target = $region183
      $region182: #{tpu_custom_call.1} parent=5 // pred_region
        %s1340 = ssub.s32 %s15, 2
        // Predicated region
        $region184: #{tpu_custom_call.1} parent=182 // pred_check
          %p1341 = pneg %p219
        $region185: #{tpu_custom_call.1} parent=182 // pred_check_branch
          %1343 = sbr.rel (%p1341) target = $region187
        $region186: #{tpu_custom_call.1} parent=182 // pred_region
          %s1344 = sand.u32 %s204, 1
          %s1345 = scalar_lea.sflag [#allocation9], %s1344
          %s1346 = sand.u32 %s204, 1
          %s1347 = smul.addr %s1346, 8
          %s1348 = scalar_lea.vmem [#allocation8], %s1347
          %1349 = dma.done %s1345, 128
        $region187: #{tpu_custom_call.1} parent=182 // pred_fallthru
          _
      $region183: #{tpu_custom_call.1} parent=5 // pred_fallthru
        _
    $region6: #{tpu_custom_call.1} parent=1 // loop_footer
      %s19 = sadd.s32 1, %s15
    $region7: #{tpu_custom_call.1} parent=1 // loop_footer_branch
      %14 = sbr.rel target = $region3
    $region8: #{tpu_custom_call.1} parent=1 // loop_exit
      _
    %1350 = vsyncpa [#allocation9], 1
    %s1351 = scalar_lea.sflag [#allocation9], 1
    %1352 = vsyncpa %s1351, 1

</llo_original>
